<compile_context>
chip_gen: v5e
topology: v5e:2x2
jax: 0.10.0
libtpu: 0.0.40
codegen_flags: <defaults>
</compile_context>

<pallas_src>
import functools

import jax
import jax.numpy as jnp
from jax import lax
from jax.experimental import pallas as pl
from jax.experimental.pallas import tpu as pltpu


def _elu(v):
    # PyTorch nn.ELU(alpha=1.0).  Negative branch uses exp(min(v,0)) - 1; at the
    # absolute tolerance checked below this is indistinguishable from expm1 and
    # avoids depending on an expm1 lowering rule.  min() keeps the dead branch
    # of where() finite.
    return jnp.where(v > 0.0, v, jnp.exp(jnp.minimum(v, 0.0)) - 1.0)


def _resblock_kernel(x_ref, w1_ref, b1_ref, w2_ref, b2_ref, o_ref,
                     pad_ref, t1_ref, t2_ref, *, W, PAD):
    """B_TILE images per grid step.

    x_ref : (B_TILE, C, P)       pixels-on-lanes activation block (P = H*W)
    w1_ref: (feas, 9*C)          K-packed conv1 weights (tap-major columns)
    b1_ref: (feas, 1)
    w2_ref: (C, 9*feas)          K-packed conv2 weights
    b2_ref: (C, 1)
    o_ref : (B_TILE, C, P)
    pad_ref: (max(C,feas), P+2*PAD)   zero-halo staging scratch (shifted reads)
    t1_ref : (9*C,    B_TILE*P)       packed tap matrix for conv1 (K x M)
    t2_ref : (9*feas, B_TILE*P)       packed tap matrix for conv2 (K x M)
    """
    b_tile, c_in, P = x_ref.shape
    feas = w1_ref.shape[0]
    c_max = pad_ref.shape[0]
    offsets = [(dy, dx) for dy in (-1, 0, 1) for dx in (-1, 0, 1)]

    # Column masks for the dx = -1 / +1 taps (kill the row wrap-around of the
    # flattened H*W layout).  Built in-kernel: a handful of VPU ops per step.
    col = lax.broadcasted_iota(jnp.int32, (1, P), 1) % W
    m_left = (col != 0).astype(jnp.float32)
    m_right = (col != W - 1).astype(jnp.float32)

    # Zero the halo strips once per grid step.  Do NOT guard this with
    # pl.when(program_id == 0): each core has its own scratch under megacore
    # sharding and only one core sees program_id == 0.
    pad_ref[:, :PAD] = jnp.zeros((c_max, PAD), jnp.float32)
    pad_ref[:, PAD + P:] = jnp.zeros((c_max, PAD), jnp.float32)

    def stage_taps(src, c, taps_ref, lane0):
        # src: (c, P) f32 activation of one image.  Writes its 9 shifted+masked
        # copies as row blocks of the packed tap matrix so the whole 3x3 conv
        # becomes ONE MXU matmul with K = 9*c.
        pad_ref[:c, PAD:PAD + P] = src
        for k, (dy, dx) in enumerate(offsets):
            start = PAD + dy * W + dx                  # static lane window
            tap = pad_ref[:c, start:start + P]         # (c, P)
            if dx == -1:
                tap = tap * m_left
            elif dx == 1:
                tap = tap * m_right
            taps_ref[k * c:(k + 1) * c, lane0:lane0 + P] = tap

    # ---- ELU -> conv1 : single matmul, K = 9*C ----
    for b in range(b_tile):
        stage_taps(_elu(x_ref[b].astype(jnp.float32)), c_in, t1_ref, b * P)
    h = jnp.dot(w1_ref[...], t1_ref[...],
                preferred_element_type=jnp.float32) + b1_ref[...]
    h = _elu(h)                                        # (feas, B_TILE*P)

    # ---- conv2 : single matmul, K = 9*feas ----
    for b in range(b_tile):
        stage_taps(h[:, b * P:(b + 1) * P], feas, t2_ref, b * P)
    y = jnp.dot(w2_ref[...], t2_ref[...],
                preferred_element_type=jnp.float32) + b2_ref[...]

    # ---- residual add + store (lane-dense when P % 128 == 0) ----
    for b in range(b_tile):
        o_ref[b] = (y[:, b * P:(b + 1) * P]
                    + x_ref[b].astype(jnp.float32)).astype(o_ref.dtype)


def _pick_b_tile(n_batch):
    # Largest divisor of N that still leaves >= 2 grid steps (megacore on v7x),
    # capped so the per-step block stays modest at demo scales.
    cap = max(1, min(8, n_batch // 2))
    for bt in range(cap, 0, -1):
        if n_batch % bt == 0:
            return bt
    return 1


@jax.jit
def resblock3x3_forward(x_nchw, params):
    """x_nchw: (N, C_in, H, W).  params = ((w1, b1), (w2, b2)), OIHW conv weights."""
    (w1, b1), (w2, b2) = params
    N, C, H, W = x_nchw.shape
    feas = w1.shape[0]
    P = H * W
    # Halo must cover the largest flat shift (W + 1); rounded up to a multiple
    # of 128 so the interior scratch write stays lane-aligned.
    PAD = max(128, ((W + 1 + 127) // 128) * 128)
    b_tile = _pick_b_tile(N)
    c_max = max(C, feas)

    # NOTE: if P is not a multiple of 128 the kernel stays correct but output
    # stores degrade to masked tail stores (perf cliff, not a bug).

    # Free reshape (row-major NCHW -> (N, C, H*W)): no HBM transpose / pad copy.
    x_flat = x_nchw.reshape(N, C, P)

    # K-packed weights: column block k (= ky*3 + kx) holds w[:, :, ky, kx], so
    # conv = w_packed @ packed_taps with K = 9 * in_channels.
    w1_packed = jnp.transpose(w1, (0, 2, 3, 1)).reshape(feas, 9 * C).astype(jnp.float32)
    w2_packed = jnp.transpose(w2, (0, 2, 3, 1)).reshape(C, 9 * feas).astype(jnp.float32)
    b1_col = b1.reshape(feas, 1).astype(jnp.float32)
    b2_col = b2.reshape(C, 1).astype(jnp.float32)

    # Explicit VMEM budget sized from the real block + scratch footprint
    # (double-buffered blocks/weights + tap scratches + temporaries), with
    # headroom, clamped to what every TPU generation physically has.
    f32 = 4
    blocks = 2 * (2 * b_tile * C * P) * f32
    weights = 2 * (feas * 9 * C + C * 9 * feas + feas + C) * f32
    scratch = (c_max * (P + 2 * PAD) + 9 * (C + feas) * b_tile * P) * f32
    temps = 6 * c_max * b_tile * P * f32
    vmem_limit = int(min(64 * 2 ** 20, max(32 * 2 ** 20, 1.5 * (blocks + weights + scratch + temps))))

    kernel = functools.partial(_resblock_kernel, W=W, PAD=PAD)

    out_flat = pl.pallas_call(
        kernel,
        out_shape=jax.ShapeDtypeStruct((N, C, P), x_nchw.dtype),
        grid_spec=pltpu.PrefetchScalarGridSpec(
            num_scalar_prefetch=0,
            grid=(N // b_tile,),
            in_specs=[
                pl.BlockSpec((b_tile, C, P), lambda n: (n, 0, 0)),
                pl.BlockSpec((feas, 9 * C), lambda n: (0, 0)),
                pl.BlockSpec((feas, 1), lambda n: (0, 0)),
                pl.BlockSpec((C, 9 * feas), lambda n: (0, 0)),
                pl.BlockSpec((C, 1), lambda n: (0, 0)),
            ],
            out_specs=pl.BlockSpec((b_tile, C, P), lambda n: (n, 0, 0)),
            scratch_shapes=[
                pltpu.VMEM((c_max, P + 2 * PAD), jnp.float32),       # halo staging
                pltpu.VMEM((9 * C, b_tile * P), jnp.float32),        # packed taps conv1
                pltpu.VMEM((9 * feas, b_tile * P), jnp.float32),     # packed taps conv2
            ],
        ),
        compiler_params=pltpu.CompilerParams(
            dimension_semantics=("parallel",),
            vmem_limit_bytes=vmem_limit),
    )(x_flat, w1_packed, b1_col, w2_packed, b2_col)

    return out_flat.reshape(N, C, H, W)


def reference_forward(x, params):
    """Plain-JAX (XLA) reference of the PyTorch forward, for a sanity check."""
    (w1, b1), (w2, b2) = params
    dn = ("NCHW", "OIHW", "NCHW")

    def conv(v, w, b):
        out = lax.conv_general_dilated(v, w, (1, 1), ((1, 1), (1, 1)),
                                       dimension_numbers=dn,
                                       precision=lax.Precision.HIGHEST)
        return out + b[None, :, None, None]

    h = jax.nn.elu(x)
    h = jax.nn.elu(conv(h, w1, b1))
    return conv(h, w2, b2) + x


def init_params(key, input_feas, feas):
    """PyTorch-style default Conv2d init (uniform +-1/sqrt(fan_in))."""
    def conv_init(k, c_out, c_in):
        kw, kb = jax.random.split(k)
        bound = 1.0 / ((c_in * 9) ** 0.5)
        w = jax.random.uniform(kw, (c_out, c_in, 3, 3), jnp.float32, -bound, bound)
        b = jax.random.uniform(kb, (c_out,), jnp.float32, -bound, bound)
        return w, b

    k1, k2 = jax.random.split(key)
    return conv_init(k1, feas, input_feas), conv_init(k2, input_feas, feas)


if __name__ == "__main__":
    key = jax.random.PRNGKey(0)
    k_x, k_p = jax.random.split(key)

    # Small shapes consistent with the module: batch=4 (so B_TILE=2 with a
    # 2-step parallel grid), input_feas=8, feas=16, 16x16 spatial so H*W = 256
    # pixels sit lane-dense on the 128-lane axis.
    input_feas, feas = 8, 16
    x = jax.random.normal(k_x, (4, input_feas, 16, 16), jnp.float32)
    params = init_params(k_p, input_feas, feas)

    out = jax.block_until_ready(resblock3x3_forward(x, params))
    ref = reference_forward(x, params)

    assert out.shape == x.shape, out.shape
    err = float(jnp.max(jnp.abs(out - ref)))
    assert err < 2e-4, f"mismatch vs reference: max abs err {err}"
    print("KERNEL_OK")
</pallas_src>

<mosaic_0001>
module attributes {stable_mosaic.version = 11 : i64} {
  func.func @_resblock_kernel(%arg0: i32, %arg1: memref<2x8x256xf32, #tpu.memory_space<vmem>>, %arg2: memref<16x72xf32, #tpu.memory_space<vmem>>, %arg3: memref<16x1xf32, #tpu.memory_space<vmem>>, %arg4: memref<8x144xf32, #tpu.memory_space<vmem>>, %arg5: memref<8x1xf32, #tpu.memory_space<vmem>>, %arg6: memref<2x8x256xf32, #tpu.memory_space<vmem>>, %arg7: memref<16x512xf32, #tpu.memory_space<vmem>>, %arg8: memref<72x512xf32, #tpu.memory_space<vmem>>, %arg9: memref<144x512xf32, #tpu.memory_space<vmem>>) attributes {dimension_semantics = [#tpu.dimension_semantics<parallel>], iteration_bounds = array<i64: 2>, scalar_prefetch = 0 : i64, scratch_operands = 3 : i64, tpu.core_type = #tpu.core_type<tc>, window_params = [{transform_indices = @transform_0, window_bounds = array<i64: 2, 8, 256>}, {pipeline_mode = #tpu.pipeline_mode<synchronous>, transform_indices = @transform_1, window_bounds = array<i64: 16, 72>}, {pipeline_mode = #tpu.pipeline_mode<synchronous>, transform_indices = @transform_2, window_bounds = array<i64: 16, 1>}, {pipeline_mode = #tpu.pipeline_mode<synchronous>, transform_indices = @transform_3, window_bounds = array<i64: 8, 144>}, {pipeline_mode = #tpu.pipeline_mode<synchronous>, transform_indices = @transform_4, window_bounds = array<i64: 8, 1>}, {transform_indices = @transform_5, window_bounds = array<i64: 2, 8, 256>}]} {
    %0 = tpu.iota {dimensions = array<i32: 1>} : vector<1x256xi32>
    %c16_i32 = arith.constant 16 : i32
    %c0_i32 = arith.constant 0 : i32
    %1 = arith.cmpi eq, %c16_i32, %c0_i32 : i32
    %c1_i32 = arith.constant 1 : i32
    %2 = arith.select %1, %c1_i32, %c16_i32 : i32
    %3 = vector.broadcast %2 : i32 to vector<1x256xi32>
    %4 = arith.remsi %0, %3 : vector<1x256xi32>
    %c0_i32_0 = arith.constant 0 : i32
    %5 = vector.broadcast %c0_i32_0 : i32 to vector<1x256xi32>
    %6 = arith.cmpi ne, %4, %5 : vector<1x256xi32>
    %c0_i32_1 = arith.constant 0 : i32
    %7 = vector.broadcast %c0_i32_1 : i32 to vector<1x256xi32>
    %8 = arith.cmpi slt, %4, %7 : vector<1x256xi32>
    %c0_i32_2 = arith.constant 0 : i32
    %9 = arith.cmpi slt, %2, %c0_i32_2 : i32
    %10 = vector.broadcast %9 : i1 to vector<1x256xi1>
    %11 = vector.broadcast %10 : vector<1x256xi1> to vector<1x256xi1>
    %12 = arith.xori %8, %11 : vector<1x256xi1>
    %13 = arith.andi %12, %6 : vector<1x256xi1>
    %14 = vector.broadcast %2 : i32 to vector<1x256xi32>
    %15 = arith.addi %4, %14 : vector<1x256xi32>
    %16 = arith.select %13, %15, %4 : vector<1x256xi1>, vector<1x256xi32>
    %c0_i32_3 = arith.constant 0 : i32
    %17 = vector.broadcast %c0_i32_3 : i32 to vector<1x256xi32>
    %18 = arith.cmpi ne, %16, %17 : vector<1x256xi32>
    %19 = arith.extui %18 : vector<1x256xi1> to vector<1x256xi32>
    %20 = arith.sitofp %19 : vector<1x256xi32> to vector<1x256xf32>
    %c15_i32 = arith.constant 15 : i32
    %21 = vector.broadcast %c15_i32 : i32 to vector<1x256xi32>
    %22 = arith.cmpi ne, %16, %21 : vector<1x256xi32>
    %23 = arith.extui %22 : vector<1x256xi1> to vector<1x256xi32>
    %24 = arith.sitofp %23 : vector<1x256xi32> to vector<1x256xf32>
    %cst = arith.constant 0.000000e+00 : f32
    %25 = vector.broadcast %cst : f32 to vector<16x128xf32>
    %c0 = arith.constant 0 : index
    %c0_4 = arith.constant 0 : index
    %26 = vector.load %arg7[%c0, %c0_4] : memref<16x512xf32, #tpu.memory_space<vmem>>, vector<16x128xf32>
    tpu.vector_store %arg7[%c0, %c0_4], %25 {strides = array<i32>} : memref<16x512xf32, #tpu.memory_space<vmem>>, vector<16x128xf32>,
    %cst_5 = arith.constant 0.000000e+00 : f32
    %27 = vector.broadcast %cst_5 : f32 to vector<16x128xf32>
    %c0_6 = arith.constant 0 : index
    %c384 = arith.constant 384 : index
    %28 = vector.load %arg7[%c0_6, %c384] : memref<16x512xf32, #tpu.memory_space<vmem>>, vector<16x128xf32>
    tpu.vector_store %arg7[%c0_6, %c384], %27 {strides = array<i32>} : memref<16x512xf32, #tpu.memory_space<vmem>>, vector<16x128xf32>,
    %c0_7 = arith.constant 0 : index
    %c0_8 = arith.constant 0 : index
    %c0_9 = arith.constant 0 : index
    %29 = vector.load %arg1[%c0_7, %c0_8, %c0_9] : memref<2x8x256xf32, #tpu.memory_space<vmem>>, vector<1x8x256xf32>
    %30 = vector.shape_cast %29 : vector<1x8x256xf32> to vector<8x256xf32>
    %cst_10 = arith.constant 0.000000e+00 : f32
    %31 = vector.broadcast %cst_10 : f32 to vector<8x256xf32>
    %32 = arith.cmpf ogt, %30, %31 : vector<8x256xf32>
    %cst_11 = arith.constant 0.000000e+00 : f32
    %33 = vector.broadcast %cst_11 : f32 to vector<8x256xf32>
    %34 = arith.minimumf %30, %33 : vector<8x256xf32>
    %35 = math.exp %34 : vector<8x256xf32>
    %cst_12 = arith.constant 1.000000e+00 : f32
    %36 = vector.broadcast %cst_12 : f32 to vector<8x256xf32>
    %37 = arith.subf %35, %36 : vector<8x256xf32>
    %38 = arith.select %32, %30, %37 : vector<8x256xi1>, vector<8x256xf32>
    %c0_13 = arith.constant 0 : index
    %c128 = arith.constant 128 : index
    %39 = vector.load %arg7[%c0_13, %c128] : memref<16x512xf32, #tpu.memory_space<vmem>>, vector<8x256xf32>
    tpu.vector_store %arg7[%c0_13, %c128], %38 {strides = array<i32>} : memref<16x512xf32, #tpu.memory_space<vmem>>, vector<8x256xf32>,
    %c0_14 = arith.constant 0 : index
    %c111 = arith.constant 111 : index
    %40 = vector.load %arg7[%c0_14, %c111] : memref<16x512xf32, #tpu.memory_space<vmem>>, vector<8x256xf32>
    %41 = vector.broadcast %20 : vector<1x256xf32> to vector<8x256xf32>
    %42 = arith.mulf %40, %41 : vector<8x256xf32>
    %c0_15 = arith.constant 0 : index
    %c0_16 = arith.constant 0 : index
    %43 = vector.load %arg8[%c0_15, %c0_16] : memref<72x512xf32, #tpu.memory_space<vmem>>, vector<8x256xf32>
    tpu.vector_store %arg8[%c0_15, %c0_16], %42 {strides = array<i32>} : memref<72x512xf32, #tpu.memory_space<vmem>>, vector<8x256xf32>,
    %c0_17 = arith.constant 0 : index
    %c112 = arith.constant 112 : index
    %44 = vector.load %arg7[%c0_17, %c112] : memref<16x512xf32, #tpu.memory_space<vmem>>, vector<8x256xf32>
    %c8 = arith.constant 8 : index
    %c0_18 = arith.constant 0 : index
    %45 = vector.load %arg8[%c8, %c0_18] : memref<72x512xf32, #tpu.memory_space<vmem>>, vector<8x256xf32>
    tpu.vector_store %arg8[%c8, %c0_18], %44 {strides = array<i32>} : memref<72x512xf32, #tpu.memory_space<vmem>>, vector<8x256xf32>,
    %c0_19 = arith.constant 0 : index
    %c113 = arith.constant 113 : index
    %46 = vector.load %arg7[%c0_19, %c113] : memref<16x512xf32, #tpu.memory_space<vmem>>, vector<8x256xf32>
    %47 = vector.broadcast %24 : vector<1x256xf32> to vector<8x256xf32>
    %48 = arith.mulf %46, %47 : vector<8x256xf32>
    %c16 = arith.constant 16 : index
    %c0_20 = arith.constant 0 : index
    %49 = vector.load %arg8[%c16, %c0_20] : memref<72x512xf32, #tpu.memory_space<vmem>>, vector<8x256xf32>
    tpu.vector_store %arg8[%c16, %c0_20], %48 {strides = array<i32>} : memref<72x512xf32, #tpu.memory_space<vmem>>, vector<8x256xf32>,
    %c0_21 = arith.constant 0 : index
    %c127 = arith.constant 127 : index
    %50 = vector.load %arg7[%c0_21, %c127] : memref<16x512xf32, #tpu.memory_space<vmem>>, vector<8x256xf32>
    %51 = vector.broadcast %20 : vector<1x256xf32> to vector<8x256xf32>
    %52 = arith.mulf %50, %51 : vector<8x256xf32>
    %c24 = arith.constant 24 : index
    %c0_22 = arith.constant 0 : index
    %53 = vector.load %arg8[%c24, %c0_22] : memref<72x512xf32, #tpu.memory_space<vmem>>, vector<8x256xf32>
    tpu.vector_store %arg8[%c24, %c0_22], %52 {strides = array<i32>} : memref<72x512xf32, #tpu.memory_space<vmem>>, vector<8x256xf32>,
    %c0_23 = arith.constant 0 : index
    %c128_24 = arith.constant 128 : index
    %54 = vector.load %arg7[%c0_23, %c128_24] : memref<16x512xf32, #tpu.memory_space<vmem>>, vector<8x256xf32>
    %c32 = arith.constant 32 : index
    %c0_25 = arith.constant 0 : index
    %55 = vector.load %arg8[%c32, %c0_25] : memref<72x512xf32, #tpu.memory_space<vmem>>, vector<8x256xf32>
    tpu.vector_store %arg8[%c32, %c0_25], %54 {strides = array<i32>} : memref<72x512xf32, #tpu.memory_space<vmem>>, vector<8x256xf32>,
    %c0_26 = arith.constant 0 : index
    %c129 = arith.constant 129 : index
    %56 = vector.load %arg7[%c0_26, %c129] : memref<16x512xf32, #tpu.memory_space<vmem>>, vector<8x256xf32>
    %57 = vector.broadcast %24 : vector<1x256xf32> to vector<8x256xf32>
    %58 = arith.mulf %56, %57 : vector<8x256xf32>
    %c40 = arith.constant 40 : index
    %c0_27 = arith.constant 0 : index
    %59 = vector.load %arg8[%c40, %c0_27] : memref<72x512xf32, #tpu.memory_space<vmem>>, vector<8x256xf32>
    tpu.vector_store %arg8[%c40, %c0_27], %58 {strides = array<i32>} : memref<72x512xf32, #tpu.memory_space<vmem>>, vector<8x256xf32>,
    %c0_28 = arith.constant 0 : index
    %c143 = arith.constant 143 : index
    %60 = vector.load %arg7[%c0_28, %c143] : memref<16x512xf32, #tpu.memory_space<vmem>>, vector<8x256xf32>
    %61 = vector.broadcast %20 : vector<1x256xf32> to vector<8x256xf32>
    %62 = arith.mulf %60, %61 : vector<8x256xf32>
    %c48 = arith.constant 48 : index
    %c0_29 = arith.constant 0 : index
    %63 = vector.load %arg8[%c48, %c0_29] : memref<72x512xf32, #tpu.memory_space<vmem>>, vector<8x256xf32>
    tpu.vector_store %arg8[%c48, %c0_29], %62 {strides = array<i32>} : memref<72x512xf32, #tpu.memory_space<vmem>>, vector<8x256xf32>,
    %c0_30 = arith.constant 0 : index
    %c144 = arith.constant 144 : index
    %64 = vector.load %arg7[%c0_30, %c144] : memref<16x512xf32, #tpu.memory_space<vmem>>, vector<8x256xf32>
    %c56 = arith.constant 56 : index
    %c0_31 = arith.constant 0 : index
    %65 = vector.load %arg8[%c56, %c0_31] : memref<72x512xf32, #tpu.memory_space<vmem>>, vector<8x256xf32>
    tpu.vector_store %arg8[%c56, %c0_31], %64 {strides = array<i32>} : memref<72x512xf32, #tpu.memory_space<vmem>>, vector<8x256xf32>,
    %c0_32 = arith.constant 0 : index
    %c145 = arith.constant 145 : index
    %66 = vector.load %arg7[%c0_32, %c145] : memref<16x512xf32, #tpu.memory_space<vmem>>, vector<8x256xf32>
    %67 = vector.broadcast %24 : vector<1x256xf32> to vector<8x256xf32>
    %68 = arith.mulf %66, %67 : vector<8x256xf32>
    %c64 = arith.constant 64 : index
    %c0_33 = arith.constant 0 : index
    %69 = vector.load %arg8[%c64, %c0_33] : memref<72x512xf32, #tpu.memory_space<vmem>>, vector<8x256xf32>
    tpu.vector_store %arg8[%c64, %c0_33], %68 {strides = array<i32>} : memref<72x512xf32, #tpu.memory_space<vmem>>, vector<8x256xf32>,
    %c1 = arith.constant 1 : index
    %c0_34 = arith.constant 0 : index
    %c0_35 = arith.constant 0 : index
    %70 = vector.load %arg1[%c1, %c0_34, %c0_35] : memref<2x8x256xf32, #tpu.memory_space<vmem>>, vector<1x8x256xf32>
    %71 = vector.shape_cast %70 : vector<1x8x256xf32> to vector<8x256xf32>
    %cst_36 = arith.constant 0.000000e+00 : f32
    %72 = vector.broadcast %cst_36 : f32 to vector<8x256xf32>
    %73 = arith.cmpf ogt, %71, %72 : vector<8x256xf32>
    %cst_37 = arith.constant 0.000000e+00 : f32
    %74 = vector.broadcast %cst_37 : f32 to vector<8x256xf32>
    %75 = arith.minimumf %71, %74 : vector<8x256xf32>
    %76 = math.exp %75 : vector<8x256xf32>
    %cst_38 = arith.constant 1.000000e+00 : f32
    %77 = vector.broadcast %cst_38 : f32 to vector<8x256xf32>
    %78 = arith.subf %76, %77 : vector<8x256xf32>
    %79 = arith.select %73, %71, %78 : vector<8x256xi1>, vector<8x256xf32>
    %c0_39 = arith.constant 0 : index
    %c128_40 = arith.constant 128 : index
    %80 = vector.load %arg7[%c0_39, %c128_40] : memref<16x512xf32, #tpu.memory_space<vmem>>, vector<8x256xf32>
    tpu.vector_store %arg7[%c0_39, %c128_40], %79 {strides = array<i32>} : memref<16x512xf32, #tpu.memory_space<vmem>>, vector<8x256xf32>,
    %c0_41 = arith.constant 0 : index
    %c111_42 = arith.constant 111 : index
    %81 = vector.load %arg7[%c0_41, %c111_42] : memref<16x512xf32, #tpu.memory_space<vmem>>, vector<8x256xf32>
    %82 = vector.broadcast %20 : vector<1x256xf32> to vector<8x256xf32>
    %83 = arith.mulf %81, %82 : vector<8x256xf32>
    %c0_43 = arith.constant 0 : index
    %c256 = arith.constant 256 : index
    %84 = vector.load %arg8[%c0_43, %c256] : memref<72x512xf32, #tpu.memory_space<vmem>>, vector<8x256xf32>
    tpu.vector_store %arg8[%c0_43, %c256], %83 {strides = array<i32>} : memref<72x512xf32, #tpu.memory_space<vmem>>, vector<8x256xf32>,
    %c0_44 = arith.constant 0 : index
    %c112_45 = arith.constant 112 : index
    %85 = vector.load %arg7[%c0_44, %c112_45] : memref<16x512xf32, #tpu.memory_space<vmem>>, vector<8x256xf32>
    %c8_46 = arith.constant 8 : index
    %c256_47 = arith.constant 256 : index
    %86 = vector.load %arg8[%c8_46, %c256_47] : memref<72x512xf32, #tpu.memory_space<vmem>>, vector<8x256xf32>
    tpu.vector_store %arg8[%c8_46, %c256_47], %85 {strides = array<i32>} : memref<72x512xf32, #tpu.memory_space<vmem>>, vector<8x256xf32>,
    %c0_48 = arith.constant 0 : index
    %c113_49 = arith.constant 113 : index
    %87 = vector.load %arg7[%c0_48, %c113_49] : memref<16x512xf32, #tpu.memory_space<vmem>>, vector<8x256xf32>
    %88 = vector.broadcast %24 : vector<1x256xf32> to vector<8x256xf32>
    %89 = arith.mulf %87, %88 : vector<8x256xf32>
    %c16_50 = arith.constant 16 : index
    %c256_51 = arith.constant 256 : index
    %90 = vector.load %arg8[%c16_50, %c256_51] : memref<72x512xf32, #tpu.memory_space<vmem>>, vector<8x256xf32>
    tpu.vector_store %arg8[%c16_50, %c256_51], %89 {strides = array<i32>} : memref<72x512xf32, #tpu.memory_space<vmem>>, vector<8x256xf32>,
    %c0_52 = arith.constant 0 : index
    %c127_53 = arith.constant 127 : index
    %91 = vector.load %arg7[%c0_52, %c127_53] : memref<16x512xf32, #tpu.memory_space<vmem>>, vector<8x256xf32>
    %92 = vector.broadcast %20 : vector<1x256xf32> to vector<8x256xf32>
    %93 = arith.mulf %91, %92 : vector<8x256xf32>
    %c24_54 = arith.constant 24 : index
    %c256_55 = arith.constant 256 : index
    %94 = vector.load %arg8[%c24_54, %c256_55] : memref<72x512xf32, #tpu.memory_space<vmem>>, vector<8x256xf32>
    tpu.vector_store %arg8[%c24_54, %c256_55], %93 {strides = array<i32>} : memref<72x512xf32, #tpu.memory_space<vmem>>, vector<8x256xf32>,
    %c0_56 = arith.constant 0 : index
    %c128_57 = arith.constant 128 : index
    %95 = vector.load %arg7[%c0_56, %c128_57] : memref<16x512xf32, #tpu.memory_space<vmem>>, vector<8x256xf32>
    %c32_58 = arith.constant 32 : index
    %c256_59 = arith.constant 256 : index
    %96 = vector.load %arg8[%c32_58, %c256_59] : memref<72x512xf32, #tpu.memory_space<vmem>>, vector<8x256xf32>
    tpu.vector_store %arg8[%c32_58, %c256_59], %95 {strides = array<i32>} : memref<72x512xf32, #tpu.memory_space<vmem>>, vector<8x256xf32>,
    %c0_60 = arith.constant 0 : index
    %c129_61 = arith.constant 129 : index
    %97 = vector.load %arg7[%c0_60, %c129_61] : memref<16x512xf32, #tpu.memory_space<vmem>>, vector<8x256xf32>
    %98 = vector.broadcast %24 : vector<1x256xf32> to vector<8x256xf32>
    %99 = arith.mulf %97, %98 : vector<8x256xf32>
    %c40_62 = arith.constant 40 : index
    %c256_63 = arith.constant 256 : index
    %100 = vector.load %arg8[%c40_62, %c256_63] : memref<72x512xf32, #tpu.memory_space<vmem>>, vector<8x256xf32>
    tpu.vector_store %arg8[%c40_62, %c256_63], %99 {strides = array<i32>} : memref<72x512xf32, #tpu.memory_space<vmem>>, vector<8x256xf32>,
    %c0_64 = arith.constant 0 : index
    %c143_65 = arith.constant 143 : index
    %101 = vector.load %arg7[%c0_64, %c143_65] : memref<16x512xf32, #tpu.memory_space<vmem>>, vector<8x256xf32>
    %102 = vector.broadcast %20 : vector<1x256xf32> to vector<8x256xf32>
    %103 = arith.mulf %101, %102 : vector<8x256xf32>
    %c48_66 = arith.constant 48 : index
    %c256_67 = arith.constant 256 : index
    %104 = vector.load %arg8[%c48_66, %c256_67] : memref<72x512xf32, #tpu.memory_space<vmem>>, vector<8x256xf32>
    tpu.vector_store %arg8[%c48_66, %c256_67], %103 {strides = array<i32>} : memref<72x512xf32, #tpu.memory_space<vmem>>, vector<8x256xf32>,
    %c0_68 = arith.constant 0 : index
    %c144_69 = arith.constant 144 : index
    %105 = vector.load %arg7[%c0_68, %c144_69] : memref<16x512xf32, #tpu.memory_space<vmem>>, vector<8x256xf32>
    %c56_70 = arith.constant 56 : index
    %c256_71 = arith.constant 256 : index
    %106 = vector.load %arg8[%c56_70, %c256_71] : memref<72x512xf32, #tpu.memory_space<vmem>>, vector<8x256xf32>
    tpu.vector_store %arg8[%c56_70, %c256_71], %105 {strides = array<i32>} : memref<72x512xf32, #tpu.memory_space<vmem>>, vector<8x256xf32>,
    %c0_72 = arith.constant 0 : index
    %c145_73 = arith.constant 145 : index
    %107 = vector.load %arg7[%c0_72, %c145_73] : memref<16x512xf32, #tpu.memory_space<vmem>>, vector<8x256xf32>
    %108 = vector.broadcast %24 : vector<1x256xf32> to vector<8x256xf32>
    %109 = arith.mulf %107, %108 : vector<8x256xf32>
    %c64_74 = arith.constant 64 : index
    %c256_75 = arith.constant 256 : index
    %110 = vector.load %arg8[%c64_74, %c256_75] : memref<72x512xf32, #tpu.memory_space<vmem>>, vector<8x256xf32>
    tpu.vector_store %arg8[%c64_74, %c256_75], %109 {strides = array<i32>} : memref<72x512xf32, #tpu.memory_space<vmem>>, vector<8x256xf32>,
    %c0_76 = arith.constant 0 : index
    %c0_77 = arith.constant 0 : index
    %111 = vector.load %arg2[%c0_76, %c0_77] : memref<16x72xf32, #tpu.memory_space<vmem>>, vector<16x72xf32>
    %c0_78 = arith.constant 0 : index
    %c0_79 = arith.constant 0 : index
    %112 = vector.load %arg8[%c0_78, %c0_79] : memref<72x512xf32, #tpu.memory_space<vmem>>, vector<72x512xf32>
    %cst_80 = arith.constant dense<0.000000e+00> : vector<16x512xf32>
    %113 = tpu.matmul %111, %112, %cst_80 {dimension_numbers = #tpu.dot_dimension_numbers<[1], [0], [0], [1], [0, 0, 1, 1], [], []>} : vector<16x72xf32>, vector<72x512xf32>, vector<16x512xf32> -> vector<16x512xf32>
    %c0_81 = arith.constant 0 : index
    %c0_82 = arith.constant 0 : index
    %114 = vector.load %arg3[%c0_81, %c0_82] : memref<16x1xf32, #tpu.memory_space<vmem>>, vector<16x1xf32>
    %115 = vector.broadcast %114 : vector<16x1xf32> to vector<16x512xf32>
    %116 = arith.addf %113, %115 : vector<16x512xf32>
    %cst_83 = arith.constant 0.000000e+00 : f32
    %117 = vector.broadcast %cst_83 : f32 to vector<16x512xf32>
    %118 = arith.cmpf ogt, %116, %117 : vector<16x512xf32>
    %cst_84 = arith.constant 0.000000e+00 : f32
    %119 = vector.broadcast %cst_84 : f32 to vector<16x512xf32>
    %120 = arith.minimumf %116, %119 : vector<16x512xf32>
    %121 = math.exp %120 : vector<16x512xf32>
    %cst_85 = arith.constant 1.000000e+00 : f32
    %122 = vector.broadcast %cst_85 : f32 to vector<16x512xf32>
    %123 = arith.subf %121, %122 : vector<16x512xf32>
    %124 = arith.select %118, %116, %123 : vector<16x512xi1>, vector<16x512xf32>
    %125 = vector.extract_strided_slice %124 {offsets = [0, 0], sizes = [16, 256], strides = [1, 1]} : vector<16x512xf32> to vector<16x256xf32>
    %c0_86 = arith.constant 0 : index
    %c128_87 = arith.constant 128 : index
    %126 = vector.load %arg7[%c0_86, %c128_87] : memref<16x512xf32, #tpu.memory_space<vmem>>, vector<16x256xf32>
    tpu.vector_store %arg7[%c0_86, %c128_87], %125 {strides = array<i32>} : memref<16x512xf32, #tpu.memory_space<vmem>>, vector<16x256xf32>,
    %c0_88 = arith.constant 0 : index
    %c111_89 = arith.constant 111 : index
    %127 = vector.load %arg7[%c0_88, %c111_89] : memref<16x512xf32, #tpu.memory_space<vmem>>, vector<16x256xf32>
    %128 = vector.broadcast %20 : vector<1x256xf32> to vector<16x256xf32>
    %129 = arith.mulf %127, %128 : vector<16x256xf32>
    %c0_90 = arith.constant 0 : index
    %c0_91 = arith.constant 0 : index
    %130 = vector.load %arg9[%c0_90, %c0_91] : memref<144x512xf32, #tpu.memory_space<vmem>>, vector<16x256xf32>
    tpu.vector_store %arg9[%c0_90, %c0_91], %129 {strides = array<i32>} : memref<144x512xf32, #tpu.memory_space<vmem>>, vector<16x256xf32>,
    %c0_92 = arith.constant 0 : index
    %c112_93 = arith.constant 112 : index
    %131 = vector.load %arg7[%c0_92, %c112_93] : memref<16x512xf32, #tpu.memory_space<vmem>>, vector<16x256xf32>
    %c16_94 = arith.constant 16 : index
    %c0_95 = arith.constant 0 : index
    %132 = vector.load %arg9[%c16_94, %c0_95] : memref<144x512xf32, #tpu.memory_space<vmem>>, vector<16x256xf32>
    tpu.vector_store %arg9[%c16_94, %c0_95], %131 {strides = array<i32>} : memref<144x512xf32, #tpu.memory_space<vmem>>, vector<16x256xf32>,
    %c0_96 = arith.constant 0 : index
    %c113_97 = arith.constant 113 : index
    %133 = vector.load %arg7[%c0_96, %c113_97] : memref<16x512xf32, #tpu.memory_space<vmem>>, vector<16x256xf32>
    %134 = vector.broadcast %24 : vector<1x256xf32> to vector<16x256xf32>
    %135 = arith.mulf %133, %134 : vector<16x256xf32>
    %c32_98 = arith.constant 32 : index
    %c0_99 = arith.constant 0 : index
    %136 = vector.load %arg9[%c32_98, %c0_99] : memref<144x512xf32, #tpu.memory_space<vmem>>, vector<16x256xf32>
    tpu.vector_store %arg9[%c32_98, %c0_99], %135 {strides = array<i32>} : memref<144x512xf32, #tpu.memory_space<vmem>>, vector<16x256xf32>,
    %c0_100 = arith.constant 0 : index
    %c127_101 = arith.constant 127 : index
    %137 = vector.load %arg7[%c0_100, %c127_101] : memref<16x512xf32, #tpu.memory_space<vmem>>, vector<16x256xf32>
    %138 = vector.broadcast %20 : vector<1x256xf32> to vector<16x256xf32>
    %139 = arith.mulf %137, %138 : vector<16x256xf32>
    %c48_102 = arith.constant 48 : index
    %c0_103 = arith.constant 0 : index
    %140 = vector.load %arg9[%c48_102, %c0_103] : memref<144x512xf32, #tpu.memory_space<vmem>>, vector<16x256xf32>
    tpu.vector_store %arg9[%c48_102, %c0_103], %139 {strides = array<i32>} : memref<144x512xf32, #tpu.memory_space<vmem>>, vector<16x256xf32>,
    %c0_104 = arith.constant 0 : index
    %c128_105 = arith.constant 128 : index
    %141 = vector.load %arg7[%c0_104, %c128_105] : memref<16x512xf32, #tpu.memory_space<vmem>>, vector<16x256xf32>
    %c64_106 = arith.constant 64 : index
    %c0_107 = arith.constant 0 : index
    %142 = vector.load %arg9[%c64_106, %c0_107] : memref<144x512xf32, #tpu.memory_space<vmem>>, vector<16x256xf32>
    tpu.vector_store %arg9[%c64_106, %c0_107], %141 {strides = array<i32>} : memref<144x512xf32, #tpu.memory_space<vmem>>, vector<16x256xf32>,
    %c0_108 = arith.constant 0 : index
    %c129_109 = arith.constant 129 : index
    %143 = vector.load %arg7[%c0_108, %c129_109] : memref<16x512xf32, #tpu.memory_space<vmem>>, vector<16x256xf32>
    %144 = vector.broadcast %24 : vector<1x256xf32> to vector<16x256xf32>
    %145 = arith.mulf %143, %144 : vector<16x256xf32>
    %c80 = arith.constant 80 : index
    %c0_110 = arith.constant 0 : index
    %146 = vector.load %arg9[%c80, %c0_110] : memref<144x512xf32, #tpu.memory_space<vmem>>, vector<16x256xf32>
    tpu.vector_store %arg9[%c80, %c0_110], %145 {strides = array<i32>} : memref<144x512xf32, #tpu.memory_space<vmem>>, vector<16x256xf32>,
    %c0_111 = arith.constant 0 : index
    %c143_112 = arith.constant 143 : index
    %147 = vector.load %arg7[%c0_111, %c143_112] : memref<16x512xf32, #tpu.memory_space<vmem>>, vector<16x256xf32>
    %148 = vector.broadcast %20 : vector<1x256xf32> to vector<16x256xf32>
    %149 = arith.mulf %147, %148 : vector<16x256xf32>
    %c96 = arith.constant 96 : index
    %c0_113 = arith.constant 0 : index
    %150 = vector.load %arg9[%c96, %c0_113] : memref<144x512xf32, #tpu.memory_space<vmem>>, vector<16x256xf32>
    tpu.vector_store %arg9[%c96, %c0_113], %149 {strides = array<i32>} : memref<144x512xf32, #tpu.memory_space<vmem>>, vector<16x256xf32>,
    %c0_114 = arith.constant 0 : index
    %c144_115 = arith.constant 144 : index
    %151 = vector.load %arg7[%c0_114, %c144_115] : memref<16x512xf32, #tpu.memory_space<vmem>>, vector<16x256xf32>
    %c112_116 = arith.constant 112 : index
    %c0_117 = arith.constant 0 : index
    %152 = vector.load %arg9[%c112_116, %c0_117] : memref<144x512xf32, #tpu.memory_space<vmem>>, vector<16x256xf32>
    tpu.vector_store %arg9[%c112_116, %c0_117], %151 {strides = array<i32>} : memref<144x512xf32, #tpu.memory_space<vmem>>, vector<16x256xf32>,
    %c0_118 = arith.constant 0 : index
    %c145_119 = arith.constant 145 : index
    %153 = vector.load %arg7[%c0_118, %c145_119] : memref<16x512xf32, #tpu.memory_space<vmem>>, vector<16x256xf32>
    %154 = vector.broadcast %24 : vector<1x256xf32> to vector<16x256xf32>
    %155 = arith.mulf %153, %154 : vector<16x256xf32>
    %c128_120 = arith.constant 128 : index
    %c0_121 = arith.constant 0 : index
    %156 = vector.load %arg9[%c128_120, %c0_121] : memref<144x512xf32, #tpu.memory_space<vmem>>, vector<16x256xf32>
    tpu.vector_store %arg9[%c128_120, %c0_121], %155 {strides = array<i32>} : memref<144x512xf32, #tpu.memory_space<vmem>>, vector<16x256xf32>,
    %157 = vector.extract_strided_slice %124 {offsets = [0, 256], sizes = [16, 256], strides = [1, 1]} : vector<16x512xf32> to vector<16x256xf32>
    %c0_122 = arith.constant 0 : index
    %c128_123 = arith.constant 128 : index
    %158 = vector.load %arg7[%c0_122, %c128_123] : memref<16x512xf32, #tpu.memory_space<vmem>>, vector<16x256xf32>
    tpu.vector_store %arg7[%c0_122, %c128_123], %157 {strides = array<i32>} : memref<16x512xf32, #tpu.memory_space<vmem>>, vector<16x256xf32>,
    %c0_124 = arith.constant 0 : index
    %c111_125 = arith.constant 111 : index
    %159 = vector.load %arg7[%c0_124, %c111_125] : memref<16x512xf32, #tpu.memory_space<vmem>>, vector<16x256xf32>
    %160 = vector.broadcast %20 : vector<1x256xf32> to vector<16x256xf32>
    %161 = arith.mulf %159, %160 : vector<16x256xf32>
    %c0_126 = arith.constant 0 : index
    %c256_127 = arith.constant 256 : index
    %162 = vector.load %arg9[%c0_126, %c256_127] : memref<144x512xf32, #tpu.memory_space<vmem>>, vector<16x256xf32>
    tpu.vector_store %arg9[%c0_126, %c256_127], %161 {strides = array<i32>} : memref<144x512xf32, #tpu.memory_space<vmem>>, vector<16x256xf32>,
    %c0_128 = arith.constant 0 : index
    %c112_129 = arith.constant 112 : index
    %163 = vector.load %arg7[%c0_128, %c112_129] : memref<16x512xf32, #tpu.memory_space<vmem>>, vector<16x256xf32>
    %c16_130 = arith.constant 16 : index
    %c256_131 = arith.constant 256 : index
    %164 = vector.load %arg9[%c16_130, %c256_131] : memref<144x512xf32, #tpu.memory_space<vmem>>, vector<16x256xf32>
    tpu.vector_store %arg9[%c16_130, %c256_131], %163 {strides = array<i32>} : memref<144x512xf32, #tpu.memory_space<vmem>>, vector<16x256xf32>,
    %c0_132 = arith.constant 0 : index
    %c113_133 = arith.constant 113 : index
    %165 = vector.load %arg7[%c0_132, %c113_133] : memref<16x512xf32, #tpu.memory_space<vmem>>, vector<16x256xf32>
    %166 = vector.broadcast %24 : vector<1x256xf32> to vector<16x256xf32>
    %167 = arith.mulf %165, %166 : vector<16x256xf32>
    %c32_134 = arith.constant 32 : index
    %c256_135 = arith.constant 256 : index
    %168 = vector.load %arg9[%c32_134, %c256_135] : memref<144x512xf32, #tpu.memory_space<vmem>>, vector<16x256xf32>
    tpu.vector_store %arg9[%c32_134, %c256_135], %167 {strides = array<i32>} : memref<144x512xf32, #tpu.memory_space<vmem>>, vector<16x256xf32>,
    %c0_136 = arith.constant 0 : index
    %c127_137 = arith.constant 127 : index
    %169 = vector.load %arg7[%c0_136, %c127_137] : memref<16x512xf32, #tpu.memory_space<vmem>>, vector<16x256xf32>
    %170 = vector.broadcast %20 : vector<1x256xf32> to vector<16x256xf32>
    %171 = arith.mulf %169, %170 : vector<16x256xf32>
    %c48_138 = arith.constant 48 : index
    %c256_139 = arith.constant 256 : index
    %172 = vector.load %arg9[%c48_138, %c256_139] : memref<144x512xf32, #tpu.memory_space<vmem>>, vector<16x256xf32>
    tpu.vector_store %arg9[%c48_138, %c256_139], %171 {strides = array<i32>} : memref<144x512xf32, #tpu.memory_space<vmem>>, vector<16x256xf32>,
    %c0_140 = arith.constant 0 : index
    %c128_141 = arith.constant 128 : index
    %173 = vector.load %arg7[%c0_140, %c128_141] : memref<16x512xf32, #tpu.memory_space<vmem>>, vector<16x256xf32>
    %c64_142 = arith.constant 64 : index
    %c256_143 = arith.constant 256 : index
    %174 = vector.load %arg9[%c64_142, %c256_143] : memref<144x512xf32, #tpu.memory_space<vmem>>, vector<16x256xf32>
    tpu.vector_store %arg9[%c64_142, %c256_143], %173 {strides = array<i32>} : memref<144x512xf32, #tpu.memory_space<vmem>>, vector<16x256xf32>,
    %c0_144 = arith.constant 0 : index
    %c129_145 = arith.constant 129 : index
    %175 = vector.load %arg7[%c0_144, %c129_145] : memref<16x512xf32, #tpu.memory_space<vmem>>, vector<16x256xf32>
    %176 = vector.broadcast %24 : vector<1x256xf32> to vector<16x256xf32>
    %177 = arith.mulf %175, %176 : vector<16x256xf32>
    %c80_146 = arith.constant 80 : index
    %c256_147 = arith.constant 256 : index
    %178 = vector.load %arg9[%c80_146, %c256_147] : memref<144x512xf32, #tpu.memory_space<vmem>>, vector<16x256xf32>
    tpu.vector_store %arg9[%c80_146, %c256_147], %177 {strides = array<i32>} : memref<144x512xf32, #tpu.memory_space<vmem>>, vector<16x256xf32>,
    %c0_148 = arith.constant 0 : index
    %c143_149 = arith.constant 143 : index
    %179 = vector.load %arg7[%c0_148, %c143_149] : memref<16x512xf32, #tpu.memory_space<vmem>>, vector<16x256xf32>
    %180 = vector.broadcast %20 : vector<1x256xf32> to vector<16x256xf32>
    %181 = arith.mulf %179, %180 : vector<16x256xf32>
    %c96_150 = arith.constant 96 : index
    %c256_151 = arith.constant 256 : index
    %182 = vector.load %arg9[%c96_150, %c256_151] : memref<144x512xf32, #tpu.memory_space<vmem>>, vector<16x256xf32>
    tpu.vector_store %arg9[%c96_150, %c256_151], %181 {strides = array<i32>} : memref<144x512xf32, #tpu.memory_space<vmem>>, vector<16x256xf32>,
    %c0_152 = arith.constant 0 : index
    %c144_153 = arith.constant 144 : index
    %183 = vector.load %arg7[%c0_152, %c144_153] : memref<16x512xf32, #tpu.memory_space<vmem>>, vector<16x256xf32>
    %c112_154 = arith.constant 112 : index
    %c256_155 = arith.constant 256 : index
    %184 = vector.load %arg9[%c112_154, %c256_155] : memref<144x512xf32, #tpu.memory_space<vmem>>, vector<16x256xf32>
    tpu.vector_store %arg9[%c112_154, %c256_155], %183 {strides = array<i32>} : memref<144x512xf32, #tpu.memory_space<vmem>>, vector<16x256xf32>,
    %c0_156 = arith.constant 0 : index
    %c145_157 = arith.constant 145 : index
    %185 = vector.load %arg7[%c0_156, %c145_157] : memref<16x512xf32, #tpu.memory_space<vmem>>, vector<16x256xf32>
    %186 = vector.broadcast %24 : vector<1x256xf32> to vector<16x256xf32>
    %187 = arith.mulf %185, %186 : vector<16x256xf32>
    %c128_158 = arith.constant 128 : index
    %c256_159 = arith.constant 256 : index
    %188 = vector.load %arg9[%c128_158, %c256_159] : memref<144x512xf32, #tpu.memory_space<vmem>>, vector<16x256xf32>
    tpu.vector_store %arg9[%c128_158, %c256_159], %187 {strides = array<i32>} : memref<144x512xf32, #tpu.memory_space<vmem>>, vector<16x256xf32>,
    %c0_160 = arith.constant 0 : index
    %c0_161 = arith.constant 0 : index
    %189 = vector.load %arg4[%c0_160, %c0_161] : memref<8x144xf32, #tpu.memory_space<vmem>>, vector<8x144xf32>
    %c0_162 = arith.constant 0 : index
    %c0_163 = arith.constant 0 : index
    %190 = vector.load %arg9[%c0_162, %c0_163] : memref<144x512xf32, #tpu.memory_space<vmem>>, vector<144x512xf32>
    %cst_164 = arith.constant dense<0.000000e+00> : vector<8x512xf32>
    %191 = tpu.matmul %189, %190, %cst_164 {dimension_numbers = #tpu.dot_dimension_numbers<[1], [0], [0], [1], [0, 0, 1, 1], [], []>} : vector<8x144xf32>, vector<144x512xf32>, vector<8x512xf32> -> vector<8x512xf32>
    %c0_165 = arith.constant 0 : index
    %c0_166 = arith.constant 0 : index
    %192 = vector.load %arg5[%c0_165, %c0_166] : memref<8x1xf32, #tpu.memory_space<vmem>>, vector<8x1xf32>
    %193 = vector.broadcast %192 : vector<8x1xf32> to vector<8x512xf32>
    %194 = arith.addf %191, %193 : vector<8x512xf32>
    %195 = vector.extract_strided_slice %194 {offsets = [0, 0], sizes = [8, 256], strides = [1, 1]} : vector<8x512xf32> to vector<8x256xf32>
    %c0_167 = arith.constant 0 : index
    %c0_168 = arith.constant 0 : index
    %c0_169 = arith.constant 0 : index
    %196 = vector.load %arg1[%c0_167, %c0_168, %c0_169] : memref<2x8x256xf32, #tpu.memory_space<vmem>>, vector<1x8x256xf32>
    %197 = vector.shape_cast %196 : vector<1x8x256xf32> to vector<8x256xf32>
    %198 = arith.addf %195, %197 : vector<8x256xf32>
    %c0_170 = arith.constant 0 : index
    %c0_171 = arith.constant 0 : index
    %c0_172 = arith.constant 0 : index
    %199 = vector.load %arg6[%c0_170, %c0_171, %c0_172] : memref<2x8x256xf32, #tpu.memory_space<vmem>>, vector<1x8x256xf32>
    %200 = vector.shape_cast %199 : vector<1x8x256xf32> to vector<8x256xf32>
    %201 = vector.shape_cast %198 : vector<8x256xf32> to vector<1x8x256xf32>
    tpu.vector_store %arg6[%c0_170, %c0_171, %c0_172], %201 {strides = array<i32>} : memref<2x8x256xf32, #tpu.memory_space<vmem>>, vector<1x8x256xf32>,
    %202 = vector.extract_strided_slice %194 {offsets = [0, 256], sizes = [8, 256], strides = [1, 1]} : vector<8x512xf32> to vector<8x256xf32>
    %c1_173 = arith.constant 1 : index
    %c0_174 = arith.constant 0 : index
    %c0_175 = arith.constant 0 : index
    %203 = vector.load %arg1[%c1_173, %c0_174, %c0_175] : memref<2x8x256xf32, #tpu.memory_space<vmem>>, vector<1x8x256xf32>
    %204 = vector.shape_cast %203 : vector<1x8x256xf32> to vector<8x256xf32>
    %205 = arith.addf %202, %204 : vector<8x256xf32>
    %c1_176 = arith.constant 1 : index
    %c0_177 = arith.constant 0 : index
    %c0_178 = arith.constant 0 : index
    %206 = vector.load %arg6[%c1_176, %c0_177, %c0_178] : memref<2x8x256xf32, #tpu.memory_space<vmem>>, vector<1x8x256xf32>
    %207 = vector.shape_cast %206 : vector<1x8x256xf32> to vector<8x256xf32>
    %208 = vector.shape_cast %205 : vector<8x256xf32> to vector<1x8x256xf32>
    tpu.vector_store %arg6[%c1_176, %c0_177, %c0_178], %208 {strides = array<i32>} : memref<2x8x256xf32, #tpu.memory_space<vmem>>, vector<1x8x256xf32>,
    return
  }
  func.func @transform_0(%arg0: i32) -> (i32, i32, i32) {
    %c0_i32 = arith.constant 0 : i32
    %c0_i32_0 = arith.constant 0 : i32
    %c0_i32_1 = arith.constant 0 : i32
    return %arg0, %c0_i32, %c0_i32_0 : i32, i32, i32
  }
  func.func @transform_1(%arg0: i32) -> (i32, i32) {
    %c0_i32 = arith.constant 0 : i32
    %c0_i32_0 = arith.constant 0 : i32
    %c0_i32_1 = arith.constant 0 : i32
    return %c0_i32, %c0_i32_0 : i32, i32
  }
  func.func @transform_2(%arg0: i32) -> (i32, i32) {
    %c0_i32 = arith.constant 0 : i32
    %c0_i32_0 = arith.constant 0 : i32
    %c0_i32_1 = arith.constant 0 : i32
    return %c0_i32, %c0_i32_0 : i32, i32
  }
  func.func @transform_3(%arg0: i32) -> (i32, i32) {
    %c0_i32 = arith.constant 0 : i32
    %c0_i32_0 = arith.constant 0 : i32
    %c0_i32_1 = arith.constant 0 : i32
    return %c0_i32, %c0_i32_0 : i32, i32
  }
  func.func @transform_4(%arg0: i32) -> (i32, i32) {
    %c0_i32 = arith.constant 0 : i32
    %c0_i32_0 = arith.constant 0 : i32
    %c0_i32_1 = arith.constant 0 : i32
    return %c0_i32, %c0_i32_0 : i32, i32
  }
  func.func @transform_5(%arg0: i32) -> (i32, i32, i32) {
    %c0_i32 = arith.constant 0 : i32
    %c0_i32_0 = arith.constant 0 : i32
    %c0_i32_1 = arith.constant 0 : i32
    return %arg0, %c0_i32, %c0_i32_0 : i32, i32, i32
  }
}

</mosaic_0001>

<llo_original>
// kernel: resblock3x3_forward.1
$region0: #{resblock3x3_forward.1}
  #allocation0 [shape = 'u32[]', space=smem, size = 0x4, offset = 0x4, fixed_abs, tag = 'smem constant byte address 0x4 - core index']
  #allocation1 [shape = 'u32[72,128]{1,0:T(1,128)}', space=vmem, size = 0x9000, scoped, tag = 'internal scratch']
  #allocation2 [shape = 'f32[16,512]{1,0:T(8,128)}', space=vmem, size = 0x8000, scoped, tag = 'scratch operand']
  #allocation3 [shape = 'f32[72,512]{1,0:T(8,128)}', space=vmem, size = 0x24000, scoped, tag = 'scratch operand']
  #allocation4 [shape = 'f32[144,512]{1,0:T(8,128)}', space=vmem, size = 0x48000, scoped, tag = 'scratch operand']
  %s0 = inlined_call_operand.vmem [shape: f32[4,8,256], index: 0, kind: input, shape index: {}]
  %s1 = inlined_call_operand.vmem [shape: f32[16,72], index: 1, kind: input, shape index: {}]
  %s2 = inlined_call_operand.vmem [shape: f32[16,1], index: 2, kind: input, shape index: {}]
  %s3 = inlined_call_operand.vmem [shape: f32[8,144], index: 3, kind: input, shape index: {}]
  %s4 = inlined_call_operand.vmem [shape: f32[8,1], index: 4, kind: input, shape index: {}]
  %s5 = inlined_call_operand.vmem [shape: f32[4,8,256], index: 5, kind: output, shape index: {}]
  %s6 = sld [smem:[#allocation0]]
  $region53: #{resblock3x3_forward.1} parent=0
    _
  %s8 = ssub.s32 1, %s6
  %s9 = scalar_select 0, %s8, %s6
  loop: start=0, step=1, limit=4
  $region2: #{resblock3x3_forward.1} parent=0 // loop_pre_header
    _
  $region3: #{resblock3x3_forward.1} parent=0 // loop_header
    %s11 = sphi 0, %s15
    %p12 = scmp.ge.s32.totalorder %s11, 4
    %s21 = sphi 0, %s23
    %s24 = sphi 0, %s21
    %s25 = sphi 0, %s24
    %s41 = sphi 0, %s25
    %s45 = sphi 0, %s45
    %s47 = sphi 0, %s45
    %s48 = sphi 0, %s47
    %s62 = sphi 0, %s48
    %s66 = sphi 0, %s66
    %s68 = sphi 0, %s66
    %s69 = sphi 0, %s68
    %s83 = sphi 0, %s69
    %s87 = sphi 0, %s87
    %s89 = sphi 0, %s87
    %s90 = sphi 0, %s89
    %s104 = sphi 0, %s90
    %s108 = sphi 0, %s108
    %s110 = sphi 0, %s108
    %s111 = sphi 0, %s110
    %s125 = sphi 0, %s111
    %s131 = sphi 0, %s133
    %s134 = sphi 0, %s131
    %s135 = sphi 0, %s134
    %s151 = sphi 0, %s135
  $region4: #{resblock3x3_forward.1} parent=0 // loop_header_branch
    %14 = sbr.rel (%p12) target = $region8
  $region5: #{resblock3x3_forward.1} parent=0 // loop_body
    %s16 = ssub.s32 %s11, 1
    %s17 = ssub.s32 %s11, 2
    %s18 = sadd.s32 %s11, 1
    %s19 = ssub.s32 %s11, %s18
    %p20 = scmp.eq.s32.totalorder %s19, 0
    %s22 = sadd.s32 %s21, 1
    %s23 = scalar_select %p20, %s21, %s22
    %p26 = pneg %p20
    %p27 = scmp.eq.s32.totalorder %s11, 1
    %p28 = por %p26, %p27
    %p29 = scmp.ne.s32.totalorder %s21, %s24
    %p30 = scmp.eq.s32.totalorder %s11, 0
    %p31 = por %p29, %p30
    %p32 = scmp.ne.s32.totalorder %s21, %s24
    %p33 = scmp.eq.s32.totalorder %s16, 1
    %p34 = por %p32, %p33
    %p35 = scmp.ne.s32.totalorder %s24, %s25
    %p36 = scmp.eq.s32.totalorder %s16, 0
    %p37 = por %p35, %p36
    %p38 = scmp.ne.s32.totalorder %s24, %s25
    %p39 = scmp.eq.s32.totalorder %s17, 1
    %p40 = por %p38, %p39
    %p42 = scmp.ne.s32.totalorder %s25, %s41
    %p43 = scmp.eq.s32.totalorder %s17, 0
    %p44 = por %p42, %p43
    %s46 = sadd.s32 %s45, 1
    %p49 = scmp.eq.s32.totalorder %s11, 1
    %p50 = scmp.ne.s32.totalorder %s45, %s47
    %p51 = scmp.eq.s32.totalorder %s11, 0
    %p52 = por %p50, %p51
    %p53 = scmp.ne.s32.totalorder %s45, %s47
    %p54 = scmp.eq.s32.totalorder %s16, 1
    %p55 = por %p53, %p54
    %p56 = scmp.ne.s32.totalorder %s47, %s48
    %p57 = scmp.eq.s32.totalorder %s16, 0
    %p58 = por %p56, %p57
    %p59 = scmp.ne.s32.totalorder %s47, %s48
    %p60 = scmp.eq.s32.totalorder %s17, 1
    %p61 = por %p59, %p60
    %p63 = scmp.ne.s32.totalorder %s48, %s62
    %p64 = scmp.eq.s32.totalorder %s17, 0
    %p65 = por %p63, %p64
    %s67 = sadd.s32 %s66, 1
    %p70 = scmp.eq.s32.totalorder %s11, 1
    %p71 = scmp.ne.s32.totalorder %s66, %s68
    %p72 = scmp.eq.s32.totalorder %s11, 0
    %p73 = por %p71, %p72
    %p74 = scmp.ne.s32.totalorder %s66, %s68
    %p75 = scmp.eq.s32.totalorder %s16, 1
    %p76 = por %p74, %p75
    %p77 = scmp.ne.s32.totalorder %s68, %s69
    %p78 = scmp.eq.s32.totalorder %s16, 0
    %p79 = por %p77, %p78
    %p80 = scmp.ne.s32.totalorder %s68, %s69
    %p81 = scmp.eq.s32.totalorder %s17, 1
    %p82 = por %p80, %p81
    %p84 = scmp.ne.s32.totalorder %s69, %s83
    %p85 = scmp.eq.s32.totalorder %s17, 0
    %p86 = por %p84, %p85
    %s88 = sadd.s32 %s87, 1
    %p91 = scmp.eq.s32.totalorder %s11, 1
    %p92 = scmp.ne.s32.totalorder %s87, %s89
    %p93 = scmp.eq.s32.totalorder %s11, 0
    %p94 = por %p92, %p93
    %p95 = scmp.ne.s32.totalorder %s87, %s89
    %p96 = scmp.eq.s32.totalorder %s16, 1
    %p97 = por %p95, %p96
    %p98 = scmp.ne.s32.totalorder %s89, %s90
    %p99 = scmp.eq.s32.totalorder %s16, 0
    %p100 = por %p98, %p99
    %p101 = scmp.ne.s32.totalorder %s89, %s90
    %p102 = scmp.eq.s32.totalorder %s17, 1
    %p103 = por %p101, %p102
    %p105 = scmp.ne.s32.totalorder %s90, %s104
    %p106 = scmp.eq.s32.totalorder %s17, 0
    %p107 = por %p105, %p106
    %s109 = sadd.s32 %s108, 1
    %p112 = scmp.eq.s32.totalorder %s11, 1
    %p113 = scmp.ne.s32.totalorder %s108, %s110
    %p114 = scmp.eq.s32.totalorder %s11, 0
    %p115 = por %p113, %p114
    %p116 = scmp.ne.s32.totalorder %s108, %s110
    %p117 = scmp.eq.s32.totalorder %s16, 1
    %p118 = por %p116, %p117
    %p119 = scmp.ne.s32.totalorder %s110, %s111
    %p120 = scmp.eq.s32.totalorder %s16, 0
    %p121 = por %p119, %p120
    %p122 = scmp.ne.s32.totalorder %s110, %s111
    %p123 = scmp.eq.s32.totalorder %s17, 1
    %p124 = por %p122, %p123
    %p126 = scmp.ne.s32.totalorder %s111, %s125
    %p127 = scmp.eq.s32.totalorder %s17, 0
    %p128 = por %p126, %p127
    %s129 = ssub.s32 %s11, %s18
    %p130 = scmp.eq.s32.totalorder %s129, 0
    %s132 = sadd.s32 %s131, 1
    %s133 = scalar_select %p130, %s131, %s132
    %p136 = pneg %p130
    %p137 = scmp.eq.s32.totalorder %s11, 1
    %p138 = por %p136, %p137
    %p139 = scmp.ne.s32.totalorder %s131, %s134
    %p140 = scmp.eq.s32.totalorder %s11, 0
    %p141 = por %p139, %p140
    %p142 = scmp.ne.s32.totalorder %s131, %s134
    %p143 = scmp.eq.s32.totalorder %s16, 1
    %p144 = por %p142, %p143
    %p145 = scmp.ne.s32.totalorder %s134, %s135
    %p146 = scmp.eq.s32.totalorder %s16, 0
    %p147 = por %p145, %p146
    %p148 = scmp.ne.s32.totalorder %s134, %s135
    %p149 = scmp.eq.s32.totalorder %s17, 1
    %p150 = por %p148, %p149
    %p152 = scmp.ne.s32.totalorder %s135, %s151
    %p153 = scmp.eq.s32.totalorder %s17, 0
    %p154 = por %p152, %p153
    %p155 = scmp.le.s32.totalorder 1, %s11
    %p156 = scmp.lt.s32.totalorder %s11, 3
    %p157 = pnand %p155, %p156
    %p158 = pneg %p157
    // Predicated region
    $region9: #{resblock3x3_forward.1} parent=5 // pred_check
      _
    $region10: #{resblock3x3_forward.1} parent=5 // pred_check_branch
      %160 = sbr.rel (%p157) target = $region12
    $region11: #{resblock3x3_forward.1} parent=5 // pred_region
      %s161 = ssub.s32 %s11, 1
      // Predicated region
      $region13: #{resblock3x3_forward.1} parent=11 // pred_check
        %p162 = pneg %p58
      $region14: #{resblock3x3_forward.1} parent=11 // pred_check_branch
        %164 = sbr.rel (%p162) target = $region16
      $region15: #{resblock3x3_forward.1} parent=11 // pred_region
        _
      $region16: #{resblock3x3_forward.1} parent=11 // pred_fallthru
        _
      // Predicated region
      $region17: #{resblock3x3_forward.1} parent=11 // pred_check
        %p165 = pneg %p79
      $region18: #{resblock3x3_forward.1} parent=11 // pred_check_branch
        %167 = sbr.rel (%p165) target = $region20
      $region19: #{resblock3x3_forward.1} parent=11 // pred_region
        _
      $region20: #{resblock3x3_forward.1} parent=11 // pred_fallthru
        _
      // Predicated region
      $region21: #{resblock3x3_forward.1} parent=11 // pred_check
        %p168 = pneg %p100
      $region22: #{resblock3x3_forward.1} parent=11 // pred_check_branch
        %170 = sbr.rel (%p168) target = $region24
      $region23: #{resblock3x3_forward.1} parent=11 // pred_region
        _
      $region24: #{resblock3x3_forward.1} parent=11 // pred_fallthru
        _
      // Predicated region
      $region25: #{resblock3x3_forward.1} parent=11 // pred_check
        %p171 = pneg %p121
      $region26: #{resblock3x3_forward.1} parent=11 // pred_check_branch
        %173 = sbr.rel (%p171) target = $region28
      $region27: #{resblock3x3_forward.1} parent=11 // pred_region
        _
      $region28: #{resblock3x3_forward.1} parent=11 // pred_fallthru
        _
    $region12: #{resblock3x3_forward.1} parent=5 // pred_fallthru
      _
    %p174 = scmp.lt.s32.totalorder %s11, 2
    // Predicated region
    $region29: #{resblock3x3_forward.1} parent=5 // pred_check
      %p175 = pneg %p174
    $region30: #{resblock3x3_forward.1} parent=5 // pred_check_branch
      %177 = sbr.rel (%p175) target = $region32
    $region31: #{resblock3x3_forward.1} parent=5 // pred_region
      // Predicated region
      $region33: #{resblock3x3_forward.1} parent=31 // pred_check
        %p178 = pneg %p31
      $region34: #{resblock3x3_forward.1} parent=31 // pred_check_branch
        %180 = sbr.rel (%p178) target = $region36
      $region35: #{resblock3x3_forward.1} parent=31 // pred_region
        %s181 = smul.u32 2, %s11
        %p182 = scmp.lt.s32.totalorder %s181, 3
        %s183 = scalar_select %p182, %s181, 3
        %s184 = smul.addr %s183, 2
        %s185 = smul.addr %s184, 8
        %s186 = scalar_lea.vmem %s0, %s185
        %s187 = smul.u32 2, %s11
      $region36: #{resblock3x3_forward.1} parent=31 // pred_fallthru
        _
    $region32: #{resblock3x3_forward.1} parent=5 // pred_fallthru
      _
    %p188 = scmp.le.s32.totalorder 1, %s11
    %p189 = scmp.lt.s32.totalorder %s11, 3
    %p190 = pnand %p188, %p189
    %p191 = pneg %p190
    // Predicated region
    $region37: #{resblock3x3_forward.1} parent=5 // pred_check
      _
    $region38: #{resblock3x3_forward.1} parent=5 // pred_check_branch
      %193 = sbr.rel (%p190) target = $region40
    $region39: #{resblock3x3_forward.1} parent=5 // pred_region
      %s194 = ssub.s32 %s11, 1
      %s195 = smul.u32 2, %s16
      %p196 = scmp.lt.s32.totalorder %s195, 3
      %s197 = scalar_select %p196, %s195, 3
      %s198 = smul.addr %s197, 2
      %s199 = smul.addr %s198, 8
      %s200 = scalar_lea.vmem %s0, %s199
      %p201 = pneg %p37
      %p202 = pneg %p34
      %p203 = pneg %p58
      %p204 = pneg %p55
      %p205 = pneg %p79
      %p206 = pneg %p76
      %p207 = pneg %p100
      %p208 = pneg %p97
      %p209 = pneg %p121
      %p210 = pneg %p118
      %p211 = pneg %p147
      %p212 = pneg %p144
      %s213 = smul.u32 2, %s16
      %p214 = scmp.lt.s32.totalorder %s213, 3
      %s215 = scalar_select %p214, %s213, 3
      %s216 = smul.addr %s215, 2
      %s217 = smul.addr %s216, 8
      %s218 = scalar_lea.vmem %s5, %s217
      %s219 = smul.u32 2, %s16
      %p220 = scmp.lt.s32.totalorder %s219, 3
      %s221 = scalar_select %p220, %s219, 3
      %s222 = smul.addr %s221, 2
      %s223 = smul.addr %s222, 8
      %s224 = scalar_lea.vmem %s0, %s223
      %s225 = smul.u32 2, %s16
      %s226 = smul.u32 2, %s16
      %p227 = scmp.lt.s32.totalorder %s226, 3
      %s228 = scalar_select %p227, %s226, 3
      %s229 = smul.addr %s228, 2
      %s230 = smul.addr %s229, 8
      %s231 = scalar_lea.vmem %s5, %s230
      %s232 = smul.u32 2, %s16
      %v233 = vlaneseq
      %v234 = vand.u32 %v233, 127
      %v235 = vadd.s32 %v234, 128
      %vm236 = vcmp.lt.s32.totalorder %v234, 0
      %v237 = vsub.s32 0, %v234
      %v238 = vsel %vm236, %v237, %v234
      %v239 = vshrl.u32 %v238, 4
      %v240 = vand.u32 %v238, 15
      %v241 = vsub.s32 0, %v240
      %v242 = vsel %vm236, %v241, %v240
      %vm243 = vcmp.lt.s32.totalorder %v235, 0
      %v244 = vsub.s32 0, %v235
      %v245 = vsel %vm243, %v244, %v235
      %v246 = vshrl.u32 %v245, 4
      %v247 = vand.u32 %v245, 15
      %v248 = vsub.s32 0, %v247
      %v249 = vsel %vm243, %v248, %v247
      %vm250 = vcmp.ne.s32.totalorder %v242, 0
      %vm251 = vcmp.ne.s32.totalorder %v249, 0
      %vm252 = vcmp.lt.s32.totalorder %v242, 0
      %vm253 = vcmp.lt.s32.totalorder %v249, 0
      %vm254 = vmand %vm252, %vm250
      %vm255 = vmand %vm253, %vm251
      %v256 = vadd.s32 %v242, 16
      %v257 = vadd.s32 %v249, 16
      %v258 = vsel %vm254, %v256, %v242
      %v259 = vsel %vm255, %v257, %v249
      %vm260 = vcmp.ne.s32.totalorder %v258, 0
      %vm261 = vcmp.ne.s32.totalorder %v259, 0
      %v262 = vsel %vm260, 1, 0
      %v263 = vsel %vm261, 1, 0
      %v264 = vcvt.s32.f32 %v262
      %v265 = vcvt.s32.f32 %v263
      %vm266 = vcmp.ne.s32.totalorder %v258, 15
      %vm267 = vcmp.ne.s32.totalorder %v259, 15
      %v268 = vsel %vm266, 1, 0
      %v269 = vsel %vm267, 1, 0
      %v270 = vcvt.s32.f32 %v268
      %v271 = vcvt.s32.f32 %v269
      %272 = vst [vmem:[#allocation2] sm:$0xff] 0.0
      %273 = vst [vmem:[#allocation2 + $0x20] sm:$0xff] 0.0
      %274 = vst [vmem:[#allocation2 + $0x18] sm:$0xff] 0.0
      %275 = vst [vmem:[#allocation2 + $0x38] sm:$0xff] 0.0
      %v276 = vld [vmem:[%s224] sm:$0xff]
      %v277 = vld [vmem:[%s224 + $0x8] sm:$0xff]
      %vm278 = vcmp.gt.f32.partialorder %v276, 0.0
      %vm279 = vcmp.gt.f32.partialorder %v277, 0.0
      %v280 = vmin.f32 %v276, 0.0
      %v281 = vmin.f32 %v277, 0.0
      %v282 = vmul.f32 %v280, 1.442695
      %v283 = vpow.pop %v282
      %v284 = vmul.f32 %v281, 1.442695
      %v285 = vpow.pop %v284
      %v286 = vsub.f32 %v283, 1.0
      %v287 = vsub.f32 %v285, 1.0
      %v288 = vsel %vm278, %v276, %v286
      %v289 = vsel %vm279, %v277, %v287
      %290 = vst [vmem:[#allocation2 + $0x8] sm:$0xff] %v288
      %291 = vst [vmem:[#allocation2 + $0x10] sm:$0xff] %v289
      %v292 = vld [vmem:[#allocation2] sm:$0xff]
      %v293 = vld [vmem:[#allocation2 + $0x8] sm:$0xff]
      %v294 = vld [vmem:[#allocation2 + $0x10] sm:$0xff]
      %297 = vrot.lane.b32.xlu0 %v264, 111
      %v298 = vpop.permute.xlu0 %297
      %299 = vrot.lane.b32.xlu0 %v265, 111
      %v300 = vpop.permute.xlu0 %299
      %vm301 = vcmask 908288
      %v302 = vsel %vm301, %v298, %v300
      %v306 = vmul.f32 %v292, %v298
      %v307 = vmul.f32 %v293, %v302
      %v308 = vmul.f32 %v294, %v300
      %312 = vrot.lane.b32.xlu0 %v306, 17
      %v313 = vpop.permute.xlu0 %312
      %314 = vrot.lane.b32.xlu0 %v307, 17
      %v315 = vpop.permute.xlu0 %314
      %316 = vrot.lane.b32.xlu0 %v308, 17
      %v317 = vpop.permute.xlu0 %316
      %vm318 = vcmask 138240
      %v319 = vsel %vm318, %v313, %v315
      %v320 = vsel %vm318, %v315, %v317
      %323 = vst [vmem:[#allocation3] sm:$0xff] %v319
      %324 = vst [vmem:[#allocation3 + $0x8] sm:$0xff] %v320
      %v325 = vld [vmem:[#allocation2] sm:$0xff]
      %v326 = vld [vmem:[#allocation2 + $0x8] sm:$0xff]
      %v327 = vld [vmem:[#allocation2 + $0x10] sm:$0xff]
      %331 = vrot.lane.b32.xlu0 %v325, 16
      %v332 = vpop.permute.xlu0 %331
      %333 = vrot.lane.b32.xlu0 %v326, 16
      %v334 = vpop.permute.xlu0 %333
      %335 = vrot.lane.b32.xlu0 %v327, 16
      %v336 = vpop.permute.xlu0 %335
      %vm337 = vcmask 130048
      %v338 = vsel %vm337, %v332, %v334
      %v339 = vsel %vm337, %v334, %v336
      %342 = vst [vmem:[#allocation3 + $0x20] sm:$0xff] %v338
      %343 = vst [vmem:[#allocation3 + $0x28] sm:$0xff] %v339
      %v344 = vld [vmem:[#allocation2] sm:$0xff]
      %v345 = vld [vmem:[#allocation2 + $0x8] sm:$0xff]
      %v346 = vld [vmem:[#allocation2 + $0x10] sm:$0xff]
      %349 = vrot.lane.b32.xlu0 %v270, 113
      %v350 = vpop.permute.xlu0 %349
      %351 = vrot.lane.b32.xlu0 %v271, 113
      %v352 = vpop.permute.xlu0 %351
      %vm353 = vcmask 924672
      %v354 = vsel %vm353, %v350, %v352
      %v358 = vmul.f32 %v344, %v350
      %v359 = vmul.f32 %v345, %v354
      %v360 = vmul.f32 %v346, %v352
      %364 = vrot.lane.b32.xlu0 %v358, 15
      %v365 = vpop.permute.xlu0 %364
      %366 = vrot.lane.b32.xlu0 %v359, 15
      %v367 = vpop.permute.xlu0 %366
      %368 = vrot.lane.b32.xlu0 %v360, 15
      %v369 = vpop.permute.xlu0 %368
      %vm370 = vcmask 121856
      %v371 = vsel %vm370, %v365, %v367
      %v372 = vsel %vm370, %v367, %v369
      %375 = vst [vmem:[#allocation3 + $0x40] sm:$0xff] %v371
      %376 = vst [vmem:[#allocation3 + $0x48] sm:$0xff] %v372
      %v377 = vld [vmem:[#allocation2] sm:$0xff]
      %v378 = vld [vmem:[#allocation2 + $0x8] sm:$0xff]
      %v379 = vld [vmem:[#allocation2 + $0x10] sm:$0xff]
      %380 = vrot.lane.b32.xlu0 %v264, 127
      %v381 = vpop.permute.xlu0 %380
      %382 = vrot.lane.b32.xlu0 %v265, 127
      %v383 = vpop.permute.xlu0 %382
      %vm384 = vcmask 1039360
      %v385 = vsel %vm384, %v381, %v383
      %v389 = vmul.f32 %v377, %v381
      %v390 = vmul.f32 %v378, %v385
      %v391 = vmul.f32 %v379, %v383
      %395 = vrot.lane.b32.xlu0 %v389, 1
      %v396 = vpop.permute.xlu0 %395
      %397 = vrot.lane.b32.xlu0 %v390, 1
      %v398 = vpop.permute.xlu0 %397
      %399 = vrot.lane.b32.xlu0 %v391, 1
      %v400 = vpop.permute.xlu0 %399
      %vm401 = vcmask 7168
      %v402 = vsel %vm401, %v396, %v398
      %v403 = vsel %vm401, %v398, %v400
      %406 = vst [vmem:[#allocation3 + $0x60] sm:$0xff] %v402
      %407 = vst [vmem:[#allocation3 + $0x68] sm:$0xff] %v403
      %v408 = vld [vmem:[#allocation2 + $0x8] sm:$0xff]
      %v409 = vld [vmem:[#allocation2 + $0x10] sm:$0xff]
      %410 = vst [vmem:[#allocation3 + $0x80] sm:$0xff] %v408
      %411 = vst [vmem:[#allocation3 + $0x88] sm:$0xff] %v409
      %v412 = vld [vmem:[#allocation2 + $0x8] sm:$0xff]
      %v413 = vld [vmem:[#allocation2 + $0x10] sm:$0xff]
      %v414 = vld [vmem:[#allocation2 + $0x18] sm:$0xff]
      %415 = vrot.lane.b32.xlu0 %v270, 1
      %v416 = vpop.permute.xlu0 %415
      %417 = vrot.lane.b32.xlu0 %v271, 1
      %v418 = vpop.permute.xlu0 %417
      %v419 = vsel %vm401, %v416, %v418
      %v423 = vmul.f32 %v412, %v416
      %v424 = vmul.f32 %v413, %v419
      %v425 = vmul.f32 %v414, %v418
      %429 = vrot.lane.b32.xlu0 %v423, 127
      %v430 = vpop.permute.xlu0 %429
      %431 = vrot.lane.b32.xlu0 %v424, 127
      %v432 = vpop.permute.xlu0 %431
      %433 = vrot.lane.b32.xlu0 %v425, 127
      %v434 = vpop.permute.xlu0 %433
      %v435 = vsel %vm384, %v430, %v432
      %v436 = vsel %vm384, %v432, %v434
      %439 = vst [vmem:[#allocation3 + $0xa0] sm:$0xff] %v435
      %440 = vst [vmem:[#allocation3 + $0xa8] sm:$0xff] %v436
      %v441 = vld [vmem:[#allocation2 + $0x8] sm:$0xff]
      %v442 = vld [vmem:[#allocation2 + $0x10] sm:$0xff]
      %v443 = vld [vmem:[#allocation2 + $0x18] sm:$0xff]
      %444 = vrot.lane.b32.xlu0 %v264, 15
      %v445 = vpop.permute.xlu0 %444
      %446 = vrot.lane.b32.xlu0 %v265, 15
      %v447 = vpop.permute.xlu0 %446
      %v448 = vsel %vm370, %v445, %v447
      %v452 = vmul.f32 %v441, %v445
      %v453 = vmul.f32 %v442, %v448
      %v454 = vmul.f32 %v443, %v447
      %458 = vrot.lane.b32.xlu0 %v452, 113
      %v459 = vpop.permute.xlu0 %458
      %460 = vrot.lane.b32.xlu0 %v453, 113
      %v461 = vpop.permute.xlu0 %460
      %462 = vrot.lane.b32.xlu0 %v454, 113
      %v463 = vpop.permute.xlu0 %462
      %v464 = vsel %vm353, %v459, %v461
      %v465 = vsel %vm353, %v461, %v463
      %468 = vst [vmem:[#allocation3 + $0xc0] sm:$0xff] %v464
      %469 = vst [vmem:[#allocation3 + $0xc8] sm:$0xff] %v465
      %v470 = vld [vmem:[#allocation2 + $0x8] sm:$0xff]
      %v471 = vld [vmem:[#allocation2 + $0x10] sm:$0xff]
      %v472 = vld [vmem:[#allocation2 + $0x18] sm:$0xff]
      %476 = vrot.lane.b32.xlu0 %v470, 112
      %v477 = vpop.permute.xlu0 %476
      %478 = vrot.lane.b32.xlu0 %v471, 112
      %v479 = vpop.permute.xlu0 %478
      %480 = vrot.lane.b32.xlu0 %v472, 112
      %v481 = vpop.permute.xlu0 %480
      %vm482 = vcmask 916480
      %v483 = vsel %vm482, %v477, %v479
      %v484 = vsel %vm482, %v479, %v481
      %487 = vst [vmem:[#allocation3 + $0xe0] sm:$0xff] %v483
      %488 = vst [vmem:[#allocation3 + $0xe8] sm:$0xff] %v484
      %v489 = vld [vmem:[#allocation2 + $0x8] sm:$0xff]
      %v490 = vld [vmem:[#allocation2 + $0x10] sm:$0xff]
      %v491 = vld [vmem:[#allocation2 + $0x18] sm:$0xff]
      %492 = vrot.lane.b32.xlu0 %v270, 17
      %v493 = vpop.permute.xlu0 %492
      %494 = vrot.lane.b32.xlu0 %v271, 17
      %v495 = vpop.permute.xlu0 %494
      %v496 = vsel %vm318, %v493, %v495
      %v500 = vmul.f32 %v489, %v493
      %v501 = vmul.f32 %v490, %v496
      %v502 = vmul.f32 %v491, %v495
      %506 = vrot.lane.b32.xlu0 %v500, 111
      %v507 = vpop.permute.xlu0 %506
      %508 = vrot.lane.b32.xlu0 %v501, 111
      %v509 = vpop.permute.xlu0 %508
      %510 = vrot.lane.b32.xlu0 %v502, 111
      %v511 = vpop.permute.xlu0 %510
      %v512 = vsel %vm301, %v507, %v509
      %v513 = vsel %vm301, %v509, %v511
      %516 = vst [vmem:[#allocation3 + $0x100] sm:$0xff] %v512
      %517 = vst [vmem:[#allocation3 + $0x108] sm:$0xff] %v513
      %s518 = scalar_lea.vmem %s224, 16
      %v519 = vld [vmem:[%s518] sm:$0xff]
      %v520 = vld [vmem:[%s518 + $0x8] sm:$0xff]
      %vm521 = vcmp.gt.f32.partialorder %v519, 0.0
      %vm522 = vcmp.gt.f32.partialorder %v520, 0.0
      %v523 = vmin.f32 %v519, 0.0
      %v524 = vmin.f32 %v520, 0.0
      %v525 = vmul.f32 %v523, 1.442695
      %v526 = vpow.pop %v525
      %v527 = vmul.f32 %v524, 1.442695
      %v528 = vpow.pop %v527
      %v529 = vsub.f32 %v526, 1.0
      %v530 = vsub.f32 %v528, 1.0
      %v531 = vsel %vm521, %v519, %v529
      %v532 = vsel %vm522, %v520, %v530
      %533 = vst [vmem:[#allocation2 + $0x8] sm:$0xff] %v531
      %534 = vst [vmem:[#allocation2 + $0x10] sm:$0xff] %v532
      %v535 = vld [vmem:[#allocation2] sm:$0xff]
      %v536 = vld [vmem:[#allocation2 + $0x8] sm:$0xff]
      %v537 = vld [vmem:[#allocation2 + $0x10] sm:$0xff]
      %v538 = vmul.f32 %v535, %v298
      %v539 = vmul.f32 %v536, %v302
      %v540 = vmul.f32 %v537, %v300
      %544 = vrot.lane.b32.xlu0 %v538, 17
      %v545 = vpop.permute.xlu0 %544
      %546 = vrot.lane.b32.xlu0 %v539, 17
      %v547 = vpop.permute.xlu0 %546
      %548 = vrot.lane.b32.xlu0 %v540, 17
      %v549 = vpop.permute.xlu0 %548
      %v550 = vsel %vm318, %v545, %v547
      %v551 = vsel %vm318, %v547, %v549
      %554 = vst [vmem:[#allocation3 + $0x10] sm:$0xff] %v550
      %555 = vst [vmem:[#allocation3 + $0x18] sm:$0xff] %v551
      %v556 = vld [vmem:[#allocation2] sm:$0xff]
      %v557 = vld [vmem:[#allocation2 + $0x8] sm:$0xff]
      %v558 = vld [vmem:[#allocation2 + $0x10] sm:$0xff]
      %562 = vrot.lane.b32.xlu0 %v556, 16
      %v563 = vpop.permute.xlu0 %562
      %564 = vrot.lane.b32.xlu0 %v557, 16
      %v565 = vpop.permute.xlu0 %564
      %566 = vrot.lane.b32.xlu0 %v558, 16
      %v567 = vpop.permute.xlu0 %566
      %v568 = vsel %vm337, %v563, %v565
      %v569 = vsel %vm337, %v565, %v567
      %572 = vst [vmem:[#allocation3 + $0x30] sm:$0xff] %v568
      %573 = vst [vmem:[#allocation3 + $0x38] sm:$0xff] %v569
      %v574 = vld [vmem:[#allocation2] sm:$0xff]
      %v575 = vld [vmem:[#allocation2 + $0x8] sm:$0xff]
      %v576 = vld [vmem:[#allocation2 + $0x10] sm:$0xff]
      %v577 = vmul.f32 %v574, %v350
      %v578 = vmul.f32 %v575, %v354
      %v579 = vmul.f32 %v576, %v352
      %583 = vrot.lane.b32.xlu0 %v577, 15
      %v584 = vpop.permute.xlu0 %583
      %585 = vrot.lane.b32.xlu0 %v578, 15
      %v586 = vpop.permute.xlu0 %585
      %587 = vrot.lane.b32.xlu0 %v579, 15
      %v588 = vpop.permute.xlu0 %587
      %v589 = vsel %vm370, %v584, %v586
      %v590 = vsel %vm370, %v586, %v588
      %593 = vst [vmem:[#allocation3 + $0x50] sm:$0xff] %v589
      %594 = vst [vmem:[#allocation3 + $0x58] sm:$0xff] %v590
      %v595 = vld [vmem:[#allocation2] sm:$0xff]
      %v596 = vld [vmem:[#allocation2 + $0x8] sm:$0xff]
      %v597 = vld [vmem:[#allocation2 + $0x10] sm:$0xff]
      %v598 = vmul.f32 %v595, %v381
      %v599 = vmul.f32 %v596, %v385
      %v600 = vmul.f32 %v597, %v383
      %604 = vrot.lane.b32.xlu0 %v598, 1
      %v605 = vpop.permute.xlu0 %604
      %606 = vrot.lane.b32.xlu0 %v599, 1
      %v607 = vpop.permute.xlu0 %606
      %608 = vrot.lane.b32.xlu0 %v600, 1
      %v609 = vpop.permute.xlu0 %608
      %v610 = vsel %vm401, %v605, %v607
      %v611 = vsel %vm401, %v607, %v609
      %614 = vst [vmem:[#allocation3 + $0x70] sm:$0xff] %v610
      %615 = vst [vmem:[#allocation3 + $0x78] sm:$0xff] %v611
      %v616 = vld [vmem:[#allocation2 + $0x8] sm:$0xff]
      %v617 = vld [vmem:[#allocation2 + $0x10] sm:$0xff]
      %618 = vst [vmem:[#allocation3 + $0x90] sm:$0xff] %v616
      %619 = vst [vmem:[#allocation3 + $0x98] sm:$0xff] %v617
      %v620 = vld [vmem:[#allocation2 + $0x8] sm:$0xff]
      %v621 = vld [vmem:[#allocation2 + $0x10] sm:$0xff]
      %v622 = vld [vmem:[#allocation2 + $0x18] sm:$0xff]
      %v623 = vmul.f32 %v620, %v416
      %v624 = vmul.f32 %v621, %v419
      %v625 = vmul.f32 %v622, %v418
      %629 = vrot.lane.b32.xlu0 %v623, 127
      %v630 = vpop.permute.xlu0 %629
      %631 = vrot.lane.b32.xlu0 %v624, 127
      %v632 = vpop.permute.xlu0 %631
      %633 = vrot.lane.b32.xlu0 %v625, 127
      %v634 = vpop.permute.xlu0 %633
      %v635 = vsel %vm384, %v630, %v632
      %v636 = vsel %vm384, %v632, %v634
      %639 = vst [vmem:[#allocation3 + $0xb0] sm:$0xff] %v635
      %640 = vst [vmem:[#allocation3 + $0xb8] sm:$0xff] %v636
      %v641 = vld [vmem:[#allocation2 + $0x8] sm:$0xff]
      %v642 = vld [vmem:[#allocation2 + $0x10] sm:$0xff]
      %v643 = vld [vmem:[#allocation2 + $0x18] sm:$0xff]
      %v644 = vmul.f32 %v641, %v445
      %v645 = vmul.f32 %v642, %v448
      %v646 = vmul.f32 %v643, %v447
      %650 = vrot.lane.b32.xlu0 %v644, 113
      %v651 = vpop.permute.xlu0 %650
      %652 = vrot.lane.b32.xlu0 %v645, 113
      %v653 = vpop.permute.xlu0 %652
      %654 = vrot.lane.b32.xlu0 %v646, 113
      %v655 = vpop.permute.xlu0 %654
      %v656 = vsel %vm353, %v651, %v653
      %v657 = vsel %vm353, %v653, %v655
      %660 = vst [vmem:[#allocation3 + $0xd0] sm:$0xff] %v656
      %661 = vst [vmem:[#allocation3 + $0xd8] sm:$0xff] %v657
      %v662 = vld [vmem:[#allocation2 + $0x8] sm:$0xff]
      %v663 = vld [vmem:[#allocation2 + $0x10] sm:$0xff]
      %v664 = vld [vmem:[#allocation2 + $0x18] sm:$0xff]
      %668 = vrot.lane.b32.xlu0 %v662, 112
      %v669 = vpop.permute.xlu0 %668
      %670 = vrot.lane.b32.xlu0 %v663, 112
      %v671 = vpop.permute.xlu0 %670
      %672 = vrot.lane.b32.xlu0 %v664, 112
      %v673 = vpop.permute.xlu0 %672
      %v674 = vsel %vm482, %v669, %v671
      %v675 = vsel %vm482, %v671, %v673
      %678 = vst [vmem:[#allocation3 + $0xf0] sm:$0xff] %v674
      %679 = vst [vmem:[#allocation3 + $0xf8] sm:$0xff] %v675
      %v680 = vld [vmem:[#allocation2 + $0x8] sm:$0xff]
      %v681 = vld [vmem:[#allocation2 + $0x10] sm:$0xff]
      %v682 = vld [vmem:[#allocation2 + $0x18] sm:$0xff]
      %v683 = vmul.f32 %v680, %v493
      %v684 = vmul.f32 %v681, %v496
      %v685 = vmul.f32 %v682, %v495
      %689 = vrot.lane.b32.xlu0 %v683, 111
      %v690 = vpop.permute.xlu0 %689
      %691 = vrot.lane.b32.xlu0 %v684, 111
      %v692 = vpop.permute.xlu0 %691
      %693 = vrot.lane.b32.xlu0 %v685, 111
      %v694 = vpop.permute.xlu0 %693
      %v695 = vsel %vm301, %v690, %v692
      %v696 = vsel %vm301, %v692, %v694
      %699 = vst [vmem:[#allocation3 + $0x110] sm:$0xff] %v695
      %700 = vst [vmem:[#allocation3 + $0x118] sm:$0xff] %v696
      %v701 = vld [vmem:[%s1] sm:$0xff]
      %v702 = vld [vmem:[%s1 + $0x8] sm:$0xff]
      %v703 = vld [vmem:[#allocation3] sm:$0xff]
      %v704 = vld [vmem:[#allocation3 + $0x8] sm:$0xff]
      %v705 = vld [vmem:[#allocation3 + $0x10] sm:$0xff]
      %v706 = vld [vmem:[#allocation3 + $0x18] sm:$0xff]
      %v707 = vld [vmem:[#allocation3 + $0x20] sm:$0xff]
      %v708 = vld [vmem:[#allocation3 + $0x28] sm:$0xff]
      %v709 = vld [vmem:[#allocation3 + $0x30] sm:$0xff]
      %v710 = vld [vmem:[#allocation3 + $0x38] sm:$0xff]
      %v711 = vld [vmem:[#allocation3 + $0x40] sm:$0xff]
      %v712 = vld [vmem:[#allocation3 + $0x48] sm:$0xff]
      %v713 = vld [vmem:[#allocation3 + $0x50] sm:$0xff]
      %v714 = vld [vmem:[#allocation3 + $0x58] sm:$0xff]
      %v715 = vld [vmem:[#allocation3 + $0x60] sm:$0xff]
      %v716 = vld [vmem:[#allocation3 + $0x68] sm:$0xff]
      %v717 = vld [vmem:[#allocation3 + $0x70] sm:$0xff]
      %v718 = vld [vmem:[#allocation3 + $0x78] sm:$0xff]
      %v719 = vld [vmem:[#allocation3 + $0x80] sm:$0xff]
      %v720 = vld [vmem:[#allocation3 + $0x88] sm:$0xff]
      %v721 = vld [vmem:[#allocation3 + $0x90] sm:$0xff]
      %v722 = vld [vmem:[#allocation3 + $0x98] sm:$0xff]
      %v723 = vld [vmem:[#allocation3 + $0xa0] sm:$0xff]
      %v724 = vld [vmem:[#allocation3 + $0xa8] sm:$0xff]
      %v725 = vld [vmem:[#allocation3 + $0xb0] sm:$0xff]
      %v726 = vld [vmem:[#allocation3 + $0xb8] sm:$0xff]
      %v727 = vld [vmem:[#allocation3 + $0xc0] sm:$0xff]
      %v728 = vld [vmem:[#allocation3 + $0xc8] sm:$0xff]
      %v729 = vld [vmem:[#allocation3 + $0xd0] sm:$0xff]
      %v730 = vld [vmem:[#allocation3 + $0xd8] sm:$0xff]
      %v731 = vld [vmem:[#allocation3 + $0xe0] sm:$0xff]
      %v732 = vld [vmem:[#allocation3 + $0xe8] sm:$0xff]
      %v733 = vld [vmem:[#allocation3 + $0xf0] sm:$0xff]
      %v734 = vld [vmem:[#allocation3 + $0xf8] sm:$0xff]
      %v735 = vld [vmem:[#allocation3 + $0x100] sm:$0xff]
      %v736 = vld [vmem:[#allocation3 + $0x108] sm:$0xff]
      %v737 = vld [vmem:[#allocation3 + $0x110] sm:$0xff]
      %v738 = vld [vmem:[#allocation3 + $0x118] sm:$0xff]
      %v739 = vld [vmem:[%s2] sm:$0xff]
      %v740 = vld [vmem:[%s2 + $0x8] sm:$0xff]
      %742 = vset.pattern.permute.xlu0 0
      %743 = vperm.xlu0 %742, %v739
      %v744 = vpop.permute.xlu0 %743
      %747 = vset.pattern.permute.xlu0 0
      %748 = vperm.xlu0 %747, %v740
      %v749 = vpop.permute.xlu0 %748
      %vm751 = vcmask 588800
      %v753 = vsel %vm751, %v701, 0
      %v756 = vsel %vm751, %v702, 0
      %758 = vmatpush.msra.mxu0 0.0
      %759 = vmatpush.msra.mxu0 0.0
      %760 = vmatpush.msra.mxu0 0.0
      %761 = vmatpush.msra.mxu0 0.0
      %762 = vmatpush.msra.mxu0 0.0
      %763 = vmatpush.msra.mxu0 0.0
      %764 = vmatpush.msra.mxu0 0.0
      %765 = vmatpush.msra.mxu0 %v735
      %766 = vmatpush.msra.mxu0 %v731
      %767 = vmatpush.msra.mxu0 %v727
      %768 = vmatpush.msra.mxu0 %v723
      %769 = vmatpush.msra.mxu0 %v719
      %770 = vmatpush.msra.mxu0 %v715
      %771 = vmatpush.msra.mxu0 %v711
      %772 = vmatpush.msra.mxu0 %v707
      %773 = vmatpush.msra.mxu0 %v703
      %774 = vmatmul.f32.gmra.mxu0 %v753
      %v775 = vpop.f32.mrf.mxu0
      %v776 = vadd.f32 %v744, %v775
      %777 = vmatmul.f32.gmra.mxu0 %v756
      %v778 = vpop.f32.mrf.mxu0
      %v779 = vadd.f32 %v749, %v778
      %780 = vdwg.mxu0
      %781 = vmatpush.msra.mxu0 0.0
      %782 = vmatpush.msra.mxu0 0.0
      %783 = vmatpush.msra.mxu0 0.0
      %784 = vmatpush.msra.mxu0 0.0
      %785 = vmatpush.msra.mxu0 0.0
      %786 = vmatpush.msra.mxu0 0.0
      %787 = vmatpush.msra.mxu0 0.0
      %788 = vmatpush.msra.mxu0 %v736
      %789 = vmatpush.msra.mxu0 %v732
      %790 = vmatpush.msra.mxu0 %v728
      %791 = vmatpush.msra.mxu0 %v724
      %792 = vmatpush.msra.mxu0 %v720
      %793 = vmatpush.msra.mxu0 %v716
      %794 = vmatpush.msra.mxu0 %v712
      %795 = vmatpush.msra.mxu0 %v708
      %796 = vmatpush.msra.mxu0 %v704
      %797 = vmatmul.f32.gmra.mxu0 %v753
      %v798 = vpop.f32.mrf.mxu0
      %v799 = vadd.f32 %v744, %v798
      %800 = vmatmul.f32.gmra.mxu0 %v756
      %v801 = vpop.f32.mrf.mxu0
      %v802 = vadd.f32 %v749, %v801
      %803 = vdwg.mxu0
      %804 = vmatpush.msra.mxu0 0.0
      %805 = vmatpush.msra.mxu0 0.0
      %806 = vmatpush.msra.mxu0 0.0
      %807 = vmatpush.msra.mxu0 0.0
      %808 = vmatpush.msra.mxu0 0.0
      %809 = vmatpush.msra.mxu0 0.0
      %810 = vmatpush.msra.mxu0 0.0
      %811 = vmatpush.msra.mxu0 %v737
      %812 = vmatpush.msra.mxu0 %v733
      %813 = vmatpush.msra.mxu0 %v729
      %814 = vmatpush.msra.mxu0 %v725
      %815 = vmatpush.msra.mxu0 %v721
      %816 = vmatpush.msra.mxu0 %v717
      %817 = vmatpush.msra.mxu0 %v713
      %818 = vmatpush.msra.mxu0 %v709
      %819 = vmatpush.msra.mxu0 %v705
      %820 = vmatmul.f32.gmra.mxu0 %v753
      %v821 = vpop.f32.mrf.mxu0
      %v822 = vadd.f32 %v744, %v821
      %823 = vmatmul.f32.gmra.mxu0 %v756
      %v824 = vpop.f32.mrf.mxu0
      %v825 = vadd.f32 %v749, %v824
      %826 = vdwg.mxu0
      %827 = vmatpush.msra.mxu0 0.0
      %828 = vmatpush.msra.mxu0 0.0
      %829 = vmatpush.msra.mxu0 0.0
      %830 = vmatpush.msra.mxu0 0.0
      %831 = vmatpush.msra.mxu0 0.0
      %832 = vmatpush.msra.mxu0 0.0
      %833 = vmatpush.msra.mxu0 0.0
      %834 = vmatpush.msra.mxu0 %v738
      %835 = vmatpush.msra.mxu0 %v734
      %836 = vmatpush.msra.mxu0 %v730
      %837 = vmatpush.msra.mxu0 %v726
      %838 = vmatpush.msra.mxu0 %v722
      %839 = vmatpush.msra.mxu0 %v718
      %840 = vmatpush.msra.mxu0 %v714
      %841 = vmatpush.msra.mxu0 %v710
      %842 = vmatpush.msra.mxu0 %v706
      %843 = vmatmul.f32.gmra.mxu0 %v753
      %v844 = vpop.f32.mrf.mxu0
      %v845 = vadd.f32 %v744, %v844
      %846 = vmatmul.f32.gmra.mxu0 %v756
      %v847 = vpop.f32.mrf.mxu0
      %v848 = vadd.f32 %v749, %v847
      %849 = vdwg.mxu0
      %vm850 = vcmp.gt.f32.partialorder %v776, 0.0
      %vm851 = vcmp.gt.f32.partialorder %v799, 0.0
      %vm852 = vcmp.gt.f32.partialorder %v822, 0.0
      %vm853 = vcmp.gt.f32.partialorder %v845, 0.0
      %vm854 = vcmp.gt.f32.partialorder %v779, 0.0
      %vm855 = vcmp.gt.f32.partialorder %v802, 0.0
      %vm856 = vcmp.gt.f32.partialorder %v825, 0.0
      %vm857 = vcmp.gt.f32.partialorder %v848, 0.0
      %v858 = vmin.f32 %v776, 0.0
      %v859 = vmin.f32 %v799, 0.0
      %v860 = vmin.f32 %v822, 0.0
      %v861 = vmin.f32 %v845, 0.0
      %v862 = vmin.f32 %v779, 0.0
      %v863 = vmin.f32 %v802, 0.0
      %v864 = vmin.f32 %v825, 0.0
      %v865 = vmin.f32 %v848, 0.0
      %v866 = vmul.f32 %v858, 1.442695
      %v867 = vpow.pop %v866
      %v868 = vmul.f32 %v859, 1.442695
      %v869 = vpow.pop %v868
      %v870 = vmul.f32 %v860, 1.442695
      %v871 = vpow.pop %v870
      %v872 = vmul.f32 %v861, 1.442695
      %v873 = vpow.pop %v872
      %v874 = vmul.f32 %v862, 1.442695
      %v875 = vpow.pop %v874
      %v876 = vmul.f32 %v863, 1.442695
      %v877 = vpow.pop %v876
      %v878 = vmul.f32 %v864, 1.442695
      %v879 = vpow.pop %v878
      %v880 = vmul.f32 %v865, 1.442695
      %v881 = vpow.pop %v880
      %v882 = vsub.f32 %v867, 1.0
      %v883 = vsub.f32 %v869, 1.0
      %v884 = vsub.f32 %v871, 1.0
      %v885 = vsub.f32 %v873, 1.0
      %v886 = vsub.f32 %v875, 1.0
      %v887 = vsub.f32 %v877, 1.0
      %v888 = vsub.f32 %v879, 1.0
      %v889 = vsub.f32 %v881, 1.0
      %v890 = vsel %vm850, %v776, %v882
      %v891 = vsel %vm851, %v799, %v883
      %v892 = vsel %vm852, %v822, %v884
      %v893 = vsel %vm853, %v845, %v885
      %v894 = vsel %vm854, %v779, %v886
      %v895 = vsel %vm855, %v802, %v887
      %v896 = vsel %vm856, %v825, %v888
      %v897 = vsel %vm857, %v848, %v889
      %898 = vst [vmem:[#allocation2 + $0x8] sm:$0xff] %v890
      %899 = vst [vmem:[#allocation2 + $0x10] sm:$0xff] %v891
      %900 = vst [vmem:[#allocation2 + $0x28] sm:$0xff] %v894
      %901 = vst [vmem:[#allocation2 + $0x30] sm:$0xff] %v895
      %v902 = vld [vmem:[#allocation2] sm:$0xff]
      %v903 = vld [vmem:[#allocation2 + $0x8] sm:$0xff]
      %v904 = vld [vmem:[#allocation2 + $0x10] sm:$0xff]
      %v905 = vld [vmem:[#allocation2 + $0x20] sm:$0xff]
      %v906 = vld [vmem:[#allocation2 + $0x28] sm:$0xff]
      %v907 = vld [vmem:[#allocation2 + $0x30] sm:$0xff]
      %v908 = vmul.f32 %v902, %v298
      %v909 = vmul.f32 %v903, %v302
      %v910 = vmul.f32 %v904, %v300
      %v911 = vmul.f32 %v905, %v298
      %v912 = vmul.f32 %v906, %v302
      %v913 = vmul.f32 %v907, %v300
      %920 = vrot.lane.b32.xlu0 %v908, 17
      %v921 = vpop.permute.xlu0 %920
      %922 = vrot.lane.b32.xlu0 %v909, 17
      %v923 = vpop.permute.xlu0 %922
      %924 = vrot.lane.b32.xlu0 %v910, 17
      %v925 = vpop.permute.xlu0 %924
      %926 = vrot.lane.b32.xlu0 %v911, 17
      %v927 = vpop.permute.xlu0 %926
      %928 = vrot.lane.b32.xlu0 %v912, 17
      %v929 = vpop.permute.xlu0 %928
      %930 = vrot.lane.b32.xlu0 %v913, 17
      %v931 = vpop.permute.xlu0 %930
      %v932 = vsel %vm318, %v921, %v923
      %v933 = vsel %vm318, %v923, %v925
      %v934 = vsel %vm318, %v927, %v929
      %v935 = vsel %vm318, %v929, %v931
      %940 = vst [vmem:[#allocation4] sm:$0xff] %v932
      %941 = vst [vmem:[#allocation4 + $0x8] sm:$0xff] %v933
      %942 = vst [vmem:[#allocation4 + $0x20] sm:$0xff] %v934
      %943 = vst [vmem:[#allocation4 + $0x28] sm:$0xff] %v935
      %v944 = vld [vmem:[#allocation2] sm:$0xff]
      %v945 = vld [vmem:[#allocation2 + $0x8] sm:$0xff]
      %v946 = vld [vmem:[#allocation2 + $0x10] sm:$0xff]
      %v947 = vld [vmem:[#allocation2 + $0x20] sm:$0xff]
      %v948 = vld [vmem:[#allocation2 + $0x28] sm:$0xff]
      %v949 = vld [vmem:[#allocation2 + $0x30] sm:$0xff]
      %956 = vrot.lane.b32.xlu0 %v944, 16
      %v957 = vpop.permute.xlu0 %956
      %958 = vrot.lane.b32.xlu0 %v945, 16
      %v959 = vpop.permute.xlu0 %958
      %960 = vrot.lane.b32.xlu0 %v946, 16
      %v961 = vpop.permute.xlu0 %960
      %962 = vrot.lane.b32.xlu0 %v947, 16
      %v963 = vpop.permute.xlu0 %962
      %964 = vrot.lane.b32.xlu0 %v948, 16
      %v965 = vpop.permute.xlu0 %964
      %966 = vrot.lane.b32.xlu0 %v949, 16
      %v967 = vpop.permute.xlu0 %966
      %v968 = vsel %vm337, %v957, %v959
      %v969 = vsel %vm337, %v959, %v961
      %v970 = vsel %vm337, %v963, %v965
      %v971 = vsel %vm337, %v965, %v967
      %976 = vst [vmem:[#allocation4 + $0x40] sm:$0xff] %v968
      %977 = vst [vmem:[#allocation4 + $0x48] sm:$0xff] %v969
      %978 = vst [vmem:[#allocation4 + $0x60] sm:$0xff] %v970
      %979 = vst [vmem:[#allocation4 + $0x68] sm:$0xff] %v971
      %v980 = vld [vmem:[#allocation2] sm:$0xff]
      %v981 = vld [vmem:[#allocation2 + $0x8] sm:$0xff]
      %v982 = vld [vmem:[#allocation2 + $0x10] sm:$0xff]
      %v983 = vld [vmem:[#allocation2 + $0x20] sm:$0xff]
      %v984 = vld [vmem:[#allocation2 + $0x28] sm:$0xff]
      %v985 = vld [vmem:[#allocation2 + $0x30] sm:$0xff]
      %v986 = vmul.f32 %v980, %v350
      %v987 = vmul.f32 %v981, %v354
      %v988 = vmul.f32 %v982, %v352
      %v989 = vmul.f32 %v983, %v350
      %v990 = vmul.f32 %v984, %v354
      %v991 = vmul.f32 %v985, %v352
      %998 = vrot.lane.b32.xlu0 %v986, 15
      %v999 = vpop.permute.xlu0 %998
      %1000 = vrot.lane.b32.xlu0 %v987, 15
      %v1001 = vpop.permute.xlu0 %1000
      %1002 = vrot.lane.b32.xlu0 %v988, 15
      %v1003 = vpop.permute.xlu0 %1002
      %1004 = vrot.lane.b32.xlu0 %v989, 15
      %v1005 = vpop.permute.xlu0 %1004
      %1006 = vrot.lane.b32.xlu0 %v990, 15
      %v1007 = vpop.permute.xlu0 %1006
      %1008 = vrot.lane.b32.xlu0 %v991, 15
      %v1009 = vpop.permute.xlu0 %1008
      %v1010 = vsel %vm370, %v999, %v1001
      %v1011 = vsel %vm370, %v1001, %v1003
      %v1012 = vsel %vm370, %v1005, %v1007
      %v1013 = vsel %vm370, %v1007, %v1009
      %1018 = vst [vmem:[#allocation4 + $0x80] sm:$0xff] %v1010
      %1019 = vst [vmem:[#allocation4 + $0x88] sm:$0xff] %v1011
      %1020 = vst [vmem:[#allocation4 + $0xa0] sm:$0xff] %v1012
      %1021 = vst [vmem:[#allocation4 + $0xa8] sm:$0xff] %v1013
      %v1022 = vld [vmem:[#allocation2] sm:$0xff]
      %v1023 = vld [vmem:[#allocation2 + $0x8] sm:$0xff]
      %v1024 = vld [vmem:[#allocation2 + $0x10] sm:$0xff]
      %v1025 = vld [vmem:[#allocation2 + $0x20] sm:$0xff]
      %v1026 = vld [vmem:[#allocation2 + $0x28] sm:$0xff]
      %v1027 = vld [vmem:[#allocation2 + $0x30] sm:$0xff]
      %v1028 = vmul.f32 %v1022, %v381
      %v1029 = vmul.f32 %v1023, %v385
      %v1030 = vmul.f32 %v1024, %v383
      %v1031 = vmul.f32 %v1025, %v381
      %v1032 = vmul.f32 %v1026, %v385
      %v1033 = vmul.f32 %v1027, %v383
      %1040 = vrot.lane.b32.xlu0 %v1028, 1
      %v1041 = vpop.permute.xlu0 %1040
      %1042 = vrot.lane.b32.xlu0 %v1029, 1
      %v1043 = vpop.permute.xlu0 %1042
      %1044 = vrot.lane.b32.xlu0 %v1030, 1
      %v1045 = vpop.permute.xlu0 %1044
      %1046 = vrot.lane.b32.xlu0 %v1031, 1
      %v1047 = vpop.permute.xlu0 %1046
      %1048 = vrot.lane.b32.xlu0 %v1032, 1
      %v1049 = vpop.permute.xlu0 %1048
      %1050 = vrot.lane.b32.xlu0 %v1033, 1
      %v1051 = vpop.permute.xlu0 %1050
      %v1052 = vsel %vm401, %v1041, %v1043
      %v1053 = vsel %vm401, %v1043, %v1045
      %v1054 = vsel %vm401, %v1047, %v1049
      %v1055 = vsel %vm401, %v1049, %v1051
      %1060 = vst [vmem:[#allocation4 + $0xc0] sm:$0xff] %v1052
      %1061 = vst [vmem:[#allocation4 + $0xc8] sm:$0xff] %v1053
      %1062 = vst [vmem:[#allocation4 + $0xe0] sm:$0xff] %v1054
      %1063 = vst [vmem:[#allocation4 + $0xe8] sm:$0xff] %v1055
      %v1064 = vld [vmem:[#allocation2 + $0x8] sm:$0xff]
      %v1065 = vld [vmem:[#allocation2 + $0x10] sm:$0xff]
      %v1066 = vld [vmem:[#allocation2 + $0x28] sm:$0xff]
      %v1067 = vld [vmem:[#allocation2 + $0x30] sm:$0xff]
      %1068 = vst [vmem:[#allocation4 + $0x100] sm:$0xff] %v1064
      %1069 = vst [vmem:[#allocation4 + $0x108] sm:$0xff] %v1065
      %1070 = vst [vmem:[#allocation4 + $0x120] sm:$0xff] %v1066
      %1071 = vst [vmem:[#allocation4 + $0x128] sm:$0xff] %v1067
      %v1072 = vld [vmem:[#allocation2 + $0x8] sm:$0xff]
      %v1073 = vld [vmem:[#allocation2 + $0x10] sm:$0xff]
      %v1074 = vld [vmem:[#allocation2 + $0x18] sm:$0xff]
      %v1075 = vld [vmem:[#allocation2 + $0x28] sm:$0xff]
      %v1076 = vld [vmem:[#allocation2 + $0x30] sm:$0xff]
      %v1077 = vld [vmem:[#allocation2 + $0x38] sm:$0xff]
      %v1078 = vmul.f32 %v1072, %v416
      %v1079 = vmul.f32 %v1073, %v419
      %v1080 = vmul.f32 %v1074, %v418
      %v1081 = vmul.f32 %v1075, %v416
      %v1082 = vmul.f32 %v1076, %v419
      %v1083 = vmul.f32 %v1077, %v418
      %1090 = vrot.lane.b32.xlu0 %v1078, 127
      %v1091 = vpop.permute.xlu0 %1090
      %1092 = vrot.lane.b32.xlu0 %v1079, 127
      %v1093 = vpop.permute.xlu0 %1092
      %1094 = vrot.lane.b32.xlu0 %v1080, 127
      %v1095 = vpop.permute.xlu0 %1094
      %1096 = vrot.lane.b32.xlu0 %v1081, 127
      %v1097 = vpop.permute.xlu0 %1096
      %1098 = vrot.lane.b32.xlu0 %v1082, 127
      %v1099 = vpop.permute.xlu0 %1098
      %1100 = vrot.lane.b32.xlu0 %v1083, 127
      %v1101 = vpop.permute.xlu0 %1100
      %v1102 = vsel %vm384, %v1091, %v1093
      %v1103 = vsel %vm384, %v1093, %v1095
      %v1104 = vsel %vm384, %v1097, %v1099
      %v1105 = vsel %vm384, %v1099, %v1101
      %1110 = vst [vmem:[#allocation4 + $0x140] sm:$0xff] %v1102
      %1111 = vst [vmem:[#allocation4 + $0x148] sm:$0xff] %v1103
      %1112 = vst [vmem:[#allocation4 + $0x160] sm:$0xff] %v1104
      %1113 = vst [vmem:[#allocation4 + $0x168] sm:$0xff] %v1105
      %v1114 = vld [vmem:[#allocation2 + $0x8] sm:$0xff]
      %v1115 = vld [vmem:[#allocation2 + $0x10] sm:$0xff]
      %v1116 = vld [vmem:[#allocation2 + $0x18] sm:$0xff]
      %v1117 = vld [vmem:[#allocation2 + $0x28] sm:$0xff]
      %v1118 = vld [vmem:[#allocation2 + $0x30] sm:$0xff]
      %v1119 = vld [vmem:[#allocation2 + $0x38] sm:$0xff]
      %v1120 = vmul.f32 %v1114, %v445
      %v1121 = vmul.f32 %v1115, %v448
      %v1122 = vmul.f32 %v1116, %v447
      %v1123 = vmul.f32 %v1117, %v445
      %v1124 = vmul.f32 %v1118, %v448
      %v1125 = vmul.f32 %v1119, %v447
      %1132 = vrot.lane.b32.xlu0 %v1120, 113
      %v1133 = vpop.permute.xlu0 %1132
      %1134 = vrot.lane.b32.xlu0 %v1121, 113
      %v1135 = vpop.permute.xlu0 %1134
      %1136 = vrot.lane.b32.xlu0 %v1122, 113
      %v1137 = vpop.permute.xlu0 %1136
      %1138 = vrot.lane.b32.xlu0 %v1123, 113
      %v1139 = vpop.permute.xlu0 %1138
      %1140 = vrot.lane.b32.xlu0 %v1124, 113
      %v1141 = vpop.permute.xlu0 %1140
      %1142 = vrot.lane.b32.xlu0 %v1125, 113
      %v1143 = vpop.permute.xlu0 %1142
      %v1144 = vsel %vm353, %v1133, %v1135
      %v1145 = vsel %vm353, %v1135, %v1137
      %v1146 = vsel %vm353, %v1139, %v1141
      %v1147 = vsel %vm353, %v1141, %v1143
      %1152 = vst [vmem:[#allocation4 + $0x180] sm:$0xff] %v1144
      %1153 = vst [vmem:[#allocation4 + $0x188] sm:$0xff] %v1145
      %1154 = vst [vmem:[#allocation4 + $0x1a0] sm:$0xff] %v1146
      %1155 = vst [vmem:[#allocation4 + $0x1a8] sm:$0xff] %v1147
      %v1156 = vld [vmem:[#allocation2 + $0x8] sm:$0xff]
      %v1157 = vld [vmem:[#allocation2 + $0x10] sm:$0xff]
      %v1158 = vld [vmem:[#allocation2 + $0x18] sm:$0xff]
      %v1159 = vld [vmem:[#allocation2 + $0x28] sm:$0xff]
      %v1160 = vld [vmem:[#allocation2 + $0x30] sm:$0xff]
      %v1161 = vld [vmem:[#allocation2 + $0x38] sm:$0xff]
      %1168 = vrot.lane.b32.xlu0 %v1156, 112
      %v1169 = vpop.permute.xlu0 %1168
      %1170 = vrot.lane.b32.xlu0 %v1157, 112
      %v1171 = vpop.permute.xlu0 %1170
      %1172 = vrot.lane.b32.xlu0 %v1158, 112
      %v1173 = vpop.permute.xlu0 %1172
      %1174 = vrot.lane.b32.xlu0 %v1159, 112
      %v1175 = vpop.permute.xlu0 %1174
      %1176 = vrot.lane.b32.xlu0 %v1160, 112
      %v1177 = vpop.permute.xlu0 %1176
      %1178 = vrot.lane.b32.xlu0 %v1161, 112
      %v1179 = vpop.permute.xlu0 %1178
      %v1180 = vsel %vm482, %v1169, %v1171
      %v1181 = vsel %vm482, %v1171, %v1173
      %v1182 = vsel %vm482, %v1175, %v1177
      %v1183 = vsel %vm482, %v1177, %v1179
      %1188 = vst [vmem:[#allocation4 + $0x1c0] sm:$0xff] %v1180
      %1189 = vst [vmem:[#allocation4 + $0x1c8] sm:$0xff] %v1181
      %1190 = vst [vmem:[#allocation4 + $0x1e0] sm:$0xff] %v1182
      %1191 = vst [vmem:[#allocation4 + $0x1e8] sm:$0xff] %v1183
      %v1192 = vld [vmem:[#allocation2 + $0x8] sm:$0xff]
      %v1193 = vld [vmem:[#allocation2 + $0x10] sm:$0xff]
      %v1194 = vld [vmem:[#allocation2 + $0x18] sm:$0xff]
      %v1195 = vld [vmem:[#allocation2 + $0x28] sm:$0xff]
      %v1196 = vld [vmem:[#allocation2 + $0x30] sm:$0xff]
      %v1197 = vld [vmem:[#allocation2 + $0x38] sm:$0xff]
      %v1198 = vmul.f32 %v1192, %v493
      %v1199 = vmul.f32 %v1193, %v496
      %v1200 = vmul.f32 %v1194, %v495
      %v1201 = vmul.f32 %v1195, %v493
      %v1202 = vmul.f32 %v1196, %v496
      %v1203 = vmul.f32 %v1197, %v495
      %1210 = vrot.lane.b32.xlu0 %v1198, 111
      %v1211 = vpop.permute.xlu0 %1210
      %1212 = vrot.lane.b32.xlu0 %v1199, 111
      %v1213 = vpop.permute.xlu0 %1212
      %1214 = vrot.lane.b32.xlu0 %v1200, 111
      %v1215 = vpop.permute.xlu0 %1214
      %1216 = vrot.lane.b32.xlu0 %v1201, 111
      %v1217 = vpop.permute.xlu0 %1216
      %1218 = vrot.lane.b32.xlu0 %v1202, 111
      %v1219 = vpop.permute.xlu0 %1218
      %1220 = vrot.lane.b32.xlu0 %v1203, 111
      %v1221 = vpop.permute.xlu0 %1220
      %v1222 = vsel %vm301, %v1211, %v1213
      %v1223 = vsel %vm301, %v1213, %v1215
      %v1224 = vsel %vm301, %v1217, %v1219
      %v1225 = vsel %vm301, %v1219, %v1221
      %1230 = vst [vmem:[#allocation4 + $0x200] sm:$0xff] %v1222
      %1231 = vst [vmem:[#allocation4 + $0x208] sm:$0xff] %v1223
      %1232 = vst [vmem:[#allocation4 + $0x220] sm:$0xff] %v1224
      %1233 = vst [vmem:[#allocation4 + $0x228] sm:$0xff] %v1225
      %1234 = vst [vmem:[#allocation2 + $0x8] sm:$0xff] %v892
      %1235 = vst [vmem:[#allocation2 + $0x10] sm:$0xff] %v893
      %1236 = vst [vmem:[#allocation2 + $0x28] sm:$0xff] %v896
      %1237 = vst [vmem:[#allocation2 + $0x30] sm:$0xff] %v897
      %v1238 = vld [vmem:[#allocation2] sm:$0xff]
      %v1239 = vld [vmem:[#allocation2 + $0x8] sm:$0xff]
      %v1240 = vld [vmem:[#allocation2 + $0x10] sm:$0xff]
      %v1241 = vld [vmem:[#allocation2 + $0x20] sm:$0xff]
      %v1242 = vld [vmem:[#allocation2 + $0x28] sm:$0xff]
      %v1243 = vld [vmem:[#allocation2 + $0x30] sm:$0xff]
      %v1244 = vmul.f32 %v1238, %v298
      %v1245 = vmul.f32 %v1239, %v302
      %v1246 = vmul.f32 %v1240, %v300
      %v1247 = vmul.f32 %v1241, %v298
      %v1248 = vmul.f32 %v1242, %v302
      %v1249 = vmul.f32 %v1243, %v300
      %1256 = vrot.lane.b32.xlu0 %v1244, 17
      %v1257 = vpop.permute.xlu0 %1256
      %1258 = vrot.lane.b32.xlu0 %v1245, 17
      %v1259 = vpop.permute.xlu0 %1258
      %1260 = vrot.lane.b32.xlu0 %v1246, 17
      %v1261 = vpop.permute.xlu0 %1260
      %1262 = vrot.lane.b32.xlu0 %v1247, 17
      %v1263 = vpop.permute.xlu0 %1262
      %1264 = vrot.lane.b32.xlu0 %v1248, 17
      %v1265 = vpop.permute.xlu0 %1264
      %1266 = vrot.lane.b32.xlu0 %v1249, 17
      %v1267 = vpop.permute.xlu0 %1266
      %v1268 = vsel %vm318, %v1257, %v1259
      %v1269 = vsel %vm318, %v1259, %v1261
      %v1270 = vsel %vm318, %v1263, %v1265
      %v1271 = vsel %vm318, %v1265, %v1267
      %1276 = vst [vmem:[#allocation4 + $0x10] sm:$0xff] %v1268
      %1277 = vst [vmem:[#allocation4 + $0x18] sm:$0xff] %v1269
      %1278 = vst [vmem:[#allocation4 + $0x30] sm:$0xff] %v1270
      %1279 = vst [vmem:[#allocation4 + $0x38] sm:$0xff] %v1271
      %v1280 = vld [vmem:[#allocation2] sm:$0xff]
      %v1281 = vld [vmem:[#allocation2 + $0x8] sm:$0xff]
      %v1282 = vld [vmem:[#allocation2 + $0x10] sm:$0xff]
      %v1283 = vld [vmem:[#allocation2 + $0x20] sm:$0xff]
      %v1284 = vld [vmem:[#allocation2 + $0x28] sm:$0xff]
      %v1285 = vld [vmem:[#allocation2 + $0x30] sm:$0xff]
      %1292 = vrot.lane.b32.xlu0 %v1280, 16
      %v1293 = vpop.permute.xlu0 %1292
      %1294 = vrot.lane.b32.xlu0 %v1281, 16
      %v1295 = vpop.permute.xlu0 %1294
      %1296 = vrot.lane.b32.xlu0 %v1282, 16
      %v1297 = vpop.permute.xlu0 %1296
      %1298 = vrot.lane.b32.xlu0 %v1283, 16
      %v1299 = vpop.permute.xlu0 %1298
      %1300 = vrot.lane.b32.xlu0 %v1284, 16
      %v1301 = vpop.permute.xlu0 %1300
      %1302 = vrot.lane.b32.xlu0 %v1285, 16
      %v1303 = vpop.permute.xlu0 %1302
      %v1304 = vsel %vm337, %v1293, %v1295
      %v1305 = vsel %vm337, %v1295, %v1297
      %v1306 = vsel %vm337, %v1299, %v1301
      %v1307 = vsel %vm337, %v1301, %v1303
      %1312 = vst [vmem:[#allocation4 + $0x50] sm:$0xff] %v1304
      %1313 = vst [vmem:[#allocation4 + $0x58] sm:$0xff] %v1305
      %1314 = vst [vmem:[#allocation4 + $0x70] sm:$0xff] %v1306
      %1315 = vst [vmem:[#allocation4 + $0x78] sm:$0xff] %v1307
      %v1316 = vld [vmem:[#allocation2] sm:$0xff]
      %v1317 = vld [vmem:[#allocation2 + $0x8] sm:$0xff]
      %v1318 = vld [vmem:[#allocation2 + $0x10] sm:$0xff]
      %v1319 = vld [vmem:[#allocation2 + $0x20] sm:$0xff]
      %v1320 = vld [vmem:[#allocation2 + $0x28] sm:$0xff]
      %v1321 = vld [vmem:[#allocation2 + $0x30] sm:$0xff]
      %v1322 = vmul.f32 %v1316, %v350
      %v1323 = vmul.f32 %v1317, %v354
      %v1324 = vmul.f32 %v1318, %v352
      %v1325 = vmul.f32 %v1319, %v350
      %v1326 = vmul.f32 %v1320, %v354
      %v1327 = vmul.f32 %v1321, %v352
      %1334 = vrot.lane.b32.xlu0 %v1322, 15
      %v1335 = vpop.permute.xlu0 %1334
      %1336 = vrot.lane.b32.xlu0 %v1323, 15
      %v1337 = vpop.permute.xlu0 %1336
      %1338 = vrot.lane.b32.xlu0 %v1324, 15
      %v1339 = vpop.permute.xlu0 %1338
      %1340 = vrot.lane.b32.xlu0 %v1325, 15
      %v1341 = vpop.permute.xlu0 %1340
      %1342 = vrot.lane.b32.xlu0 %v1326, 15
      %v1343 = vpop.permute.xlu0 %1342
      %1344 = vrot.lane.b32.xlu0 %v1327, 15
      %v1345 = vpop.permute.xlu0 %1344
      %v1346 = vsel %vm370, %v1335, %v1337
      %v1347 = vsel %vm370, %v1337, %v1339
      %v1348 = vsel %vm370, %v1341, %v1343
      %v1349 = vsel %vm370, %v1343, %v1345
      %1354 = vst [vmem:[#allocation4 + $0x90] sm:$0xff] %v1346
      %1355 = vst [vmem:[#allocation4 + $0x98] sm:$0xff] %v1347
      %1356 = vst [vmem:[#allocation4 + $0xb0] sm:$0xff] %v1348
      %1357 = vst [vmem:[#allocation4 + $0xb8] sm:$0xff] %v1349
      %v1358 = vld [vmem:[#allocation2] sm:$0xff]
      %v1359 = vld [vmem:[#allocation2 + $0x8] sm:$0xff]
      %v1360 = vld [vmem:[#allocation2 + $0x10] sm:$0xff]
      %v1361 = vld [vmem:[#allocation2 + $0x20] sm:$0xff]
      %v1362 = vld [vmem:[#allocation2 + $0x28] sm:$0xff]
      %v1363 = vld [vmem:[#allocation2 + $0x30] sm:$0xff]
      %v1364 = vmul.f32 %v1358, %v381
      %v1365 = vmul.f32 %v1359, %v385
      %v1366 = vmul.f32 %v1360, %v383
      %v1367 = vmul.f32 %v1361, %v381
      %v1368 = vmul.f32 %v1362, %v385
      %v1369 = vmul.f32 %v1363, %v383
      %1376 = vrot.lane.b32.xlu0 %v1364, 1
      %v1377 = vpop.permute.xlu0 %1376
      %1378 = vrot.lane.b32.xlu0 %v1365, 1
      %v1379 = vpop.permute.xlu0 %1378
      %1380 = vrot.lane.b32.xlu0 %v1366, 1
      %v1381 = vpop.permute.xlu0 %1380
      %1382 = vrot.lane.b32.xlu0 %v1367, 1
      %v1383 = vpop.permute.xlu0 %1382
      %1384 = vrot.lane.b32.xlu0 %v1368, 1
      %v1385 = vpop.permute.xlu0 %1384
      %1386 = vrot.lane.b32.xlu0 %v1369, 1
      %v1387 = vpop.permute.xlu0 %1386
      %v1388 = vsel %vm401, %v1377, %v1379
      %v1389 = vsel %vm401, %v1379, %v1381
      %v1390 = vsel %vm401, %v1383, %v1385
      %v1391 = vsel %vm401, %v1385, %v1387
      %1396 = vst [vmem:[#allocation4 + $0xd0] sm:$0xff] %v1388
      %1397 = vst [vmem:[#allocation4 + $0xd8] sm:$0xff] %v1389
      %1398 = vst [vmem:[#allocation4 + $0xf0] sm:$0xff] %v1390
      %1399 = vst [vmem:[#allocation4 + $0xf8] sm:$0xff] %v1391
      %v1400 = vld [vmem:[#allocation2 + $0x8] sm:$0xff]
      %v1401 = vld [vmem:[#allocation2 + $0x10] sm:$0xff]
      %v1402 = vld [vmem:[#allocation2 + $0x28] sm:$0xff]
      %v1403 = vld [vmem:[#allocation2 + $0x30] sm:$0xff]
      %1404 = vst [vmem:[#allocation4 + $0x110] sm:$0xff] %v1400
      %1405 = vst [vmem:[#allocation4 + $0x118] sm:$0xff] %v1401
      %1406 = vst [vmem:[#allocation4 + $0x130] sm:$0xff] %v1402
      %1407 = vst [vmem:[#allocation4 + $0x138] sm:$0xff] %v1403
      %v1408 = vld [vmem:[#allocation2 + $0x8] sm:$0xff]
      %v1409 = vld [vmem:[#allocation2 + $0x10] sm:$0xff]
      %v1410 = vld [vmem:[#allocation2 + $0x18] sm:$0xff]
      %v1411 = vld [vmem:[#allocation2 + $0x28] sm:$0xff]
      %v1412 = vld [vmem:[#allocation2 + $0x30] sm:$0xff]
      %v1413 = vld [vmem:[#allocation2 + $0x38] sm:$0xff]
      %v1414 = vmul.f32 %v1408, %v416
      %v1415 = vmul.f32 %v1409, %v419
      %v1416 = vmul.f32 %v1410, %v418
      %v1417 = vmul.f32 %v1411, %v416
      %v1418 = vmul.f32 %v1412, %v419
      %v1419 = vmul.f32 %v1413, %v418
      %1426 = vrot.lane.b32.xlu0 %v1414, 127
      %v1427 = vpop.permute.xlu0 %1426
      %1428 = vrot.lane.b32.xlu0 %v1415, 127
      %v1429 = vpop.permute.xlu0 %1428
      %1430 = vrot.lane.b32.xlu0 %v1416, 127
      %v1431 = vpop.permute.xlu0 %1430
      %1432 = vrot.lane.b32.xlu0 %v1417, 127
      %v1433 = vpop.permute.xlu0 %1432
      %1434 = vrot.lane.b32.xlu0 %v1418, 127
      %v1435 = vpop.permute.xlu0 %1434
      %1436 = vrot.lane.b32.xlu0 %v1419, 127
      %v1437 = vpop.permute.xlu0 %1436
      %v1438 = vsel %vm384, %v1427, %v1429
      %v1439 = vsel %vm384, %v1429, %v1431
      %v1440 = vsel %vm384, %v1433, %v1435
      %v1441 = vsel %vm384, %v1435, %v1437
      %1446 = vst [vmem:[#allocation4 + $0x150] sm:$0xff] %v1438
      %1447 = vst [vmem:[#allocation4 + $0x158] sm:$0xff] %v1439
      %1448 = vst [vmem:[#allocation4 + $0x170] sm:$0xff] %v1440
      %1449 = vst [vmem:[#allocation4 + $0x178] sm:$0xff] %v1441
      %v1450 = vld [vmem:[#allocation2 + $0x8] sm:$0xff]
      %v1451 = vld [vmem:[#allocation2 + $0x10] sm:$0xff]
      %v1452 = vld [vmem:[#allocation2 + $0x18] sm:$0xff]
      %v1453 = vld [vmem:[#allocation2 + $0x28] sm:$0xff]
      %v1454 = vld [vmem:[#allocation2 + $0x30] sm:$0xff]
      %v1455 = vld [vmem:[#allocation2 + $0x38] sm:$0xff]
      %v1456 = vmul.f32 %v1450, %v445
      %v1457 = vmul.f32 %v1451, %v448
      %v1458 = vmul.f32 %v1452, %v447
      %v1459 = vmul.f32 %v1453, %v445
      %v1460 = vmul.f32 %v1454, %v448
      %v1461 = vmul.f32 %v1455, %v447
      %1468 = vrot.lane.b32.xlu0 %v1456, 113
      %v1469 = vpop.permute.xlu0 %1468
      %1470 = vrot.lane.b32.xlu0 %v1457, 113
      %v1471 = vpop.permute.xlu0 %1470
      %1472 = vrot.lane.b32.xlu0 %v1458, 113
      %v1473 = vpop.permute.xlu0 %1472
      %1474 = vrot.lane.b32.xlu0 %v1459, 113
      %v1475 = vpop.permute.xlu0 %1474
      %1476 = vrot.lane.b32.xlu0 %v1460, 113
      %v1477 = vpop.permute.xlu0 %1476
      %1478 = vrot.lane.b32.xlu0 %v1461, 113
      %v1479 = vpop.permute.xlu0 %1478
      %v1480 = vsel %vm353, %v1469, %v1471
      %v1481 = vsel %vm353, %v1471, %v1473
      %v1482 = vsel %vm353, %v1475, %v1477
      %v1483 = vsel %vm353, %v1477, %v1479
      %1488 = vst [vmem:[#allocation4 + $0x190] sm:$0xff] %v1480
      %1489 = vst [vmem:[#allocation4 + $0x198] sm:$0xff] %v1481
      %1490 = vst [vmem:[#allocation4 + $0x1b0] sm:$0xff] %v1482
      %1491 = vst [vmem:[#allocation4 + $0x1b8] sm:$0xff] %v1483
      %v1492 = vld [vmem:[#allocation2 + $0x8] sm:$0xff]
      %v1493 = vld [vmem:[#allocation2 + $0x10] sm:$0xff]
      %v1494 = vld [vmem:[#allocation2 + $0x18] sm:$0xff]
      %v1495 = vld [vmem:[#allocation2 + $0x28] sm:$0xff]
      %v1496 = vld [vmem:[#allocation2 + $0x30] sm:$0xff]
      %v1497 = vld [vmem:[#allocation2 + $0x38] sm:$0xff]
      %1504 = vrot.lane.b32.xlu0 %v1492, 112
      %v1505 = vpop.permute.xlu0 %1504
      %1506 = vrot.lane.b32.xlu0 %v1493, 112
      %v1507 = vpop.permute.xlu0 %1506
      %1508 = vrot.lane.b32.xlu0 %v1494, 112
      %v1509 = vpop.permute.xlu0 %1508
      %1510 = vrot.lane.b32.xlu0 %v1495, 112
      %v1511 = vpop.permute.xlu0 %1510
      %1512 = vrot.lane.b32.xlu0 %v1496, 112
      %v1513 = vpop.permute.xlu0 %1512
      %1514 = vrot.lane.b32.xlu0 %v1497, 112
      %v1515 = vpop.permute.xlu0 %1514
      %v1516 = vsel %vm482, %v1505, %v1507
      %v1517 = vsel %vm482, %v1507, %v1509
      %v1518 = vsel %vm482, %v1511, %v1513
      %v1519 = vsel %vm482, %v1513, %v1515
      %1524 = vst [vmem:[#allocation4 + $0x1d0] sm:$0xff] %v1516
      %1525 = vst [vmem:[#allocation4 + $0x1d8] sm:$0xff] %v1517
      %1526 = vst [vmem:[#allocation4 + $0x1f0] sm:$0xff] %v1518
      %1527 = vst [vmem:[#allocation4 + $0x1f8] sm:$0xff] %v1519
      %v1528 = vld [vmem:[#allocation2 + $0x8] sm:$0xff]
      %v1529 = vld [vmem:[#allocation2 + $0x10] sm:$0xff]
      %v1530 = vld [vmem:[#allocation2 + $0x18] sm:$0xff]
      %v1531 = vld [vmem:[#allocation2 + $0x28] sm:$0xff]
      %v1532 = vld [vmem:[#allocation2 + $0x30] sm:$0xff]
      %v1533 = vld [vmem:[#allocation2 + $0x38] sm:$0xff]
      %v1534 = vmul.f32 %v1528, %v493
      %v1535 = vmul.f32 %v1529, %v496
      %v1536 = vmul.f32 %v1530, %v495
      %v1537 = vmul.f32 %v1531, %v493
      %v1538 = vmul.f32 %v1532, %v496
      %v1539 = vmul.f32 %v1533, %v495
      %1546 = vrot.lane.b32.xlu0 %v1534, 111
      %v1547 = vpop.permute.xlu0 %1546
      %1548 = vrot.lane.b32.xlu0 %v1535, 111
      %v1549 = vpop.permute.xlu0 %1548
      %1550 = vrot.lane.b32.xlu0 %v1536, 111
      %v1551 = vpop.permute.xlu0 %1550
      %1552 = vrot.lane.b32.xlu0 %v1537, 111
      %v1553 = vpop.permute.xlu0 %1552
      %1554 = vrot.lane.b32.xlu0 %v1538, 111
      %v1555 = vpop.permute.xlu0 %1554
      %1556 = vrot.lane.b32.xlu0 %v1539, 111
      %v1557 = vpop.permute.xlu0 %1556
      %v1558 = vsel %vm301, %v1547, %v1549
      %v1559 = vsel %vm301, %v1549, %v1551
      %v1560 = vsel %vm301, %v1553, %v1555
      %v1561 = vsel %vm301, %v1555, %v1557
      %1566 = vst [vmem:[#allocation4 + $0x210] sm:$0xff] %v1558
      %1567 = vst [vmem:[#allocation4 + $0x218] sm:$0xff] %v1559
      %1568 = vst [vmem:[#allocation4 + $0x230] sm:$0xff] %v1560
      %1569 = vst [vmem:[#allocation4 + $0x238] sm:$0xff] %v1561
      %v1570 = vld [vmem:[%s3] sm:$0xff]
      %v1571 = vld [vmem:[%s3 + $0x8] sm:$0xff]
      %v1572 = vld [vmem:[#allocation4] sm:$0xff]
      %v1573 = vld [vmem:[#allocation4 + $0x8] sm:$0xff]
      %v1574 = vld [vmem:[#allocation4 + $0x10] sm:$0xff]
      %v1575 = vld [vmem:[#allocation4 + $0x18] sm:$0xff]
      %v1576 = vld [vmem:[#allocation4 + $0x20] sm:$0xff]
      %v1577 = vld [vmem:[#allocation4 + $0x28] sm:$0xff]
      %v1578 = vld [vmem:[#allocation4 + $0x30] sm:$0xff]
      %v1579 = vld [vmem:[#allocation4 + $0x38] sm:$0xff]
      %v1580 = vld [vmem:[#allocation4 + $0x40] sm:$0xff]
      %v1581 = vld [vmem:[#allocation4 + $0x48] sm:$0xff]
      %v1582 = vld [vmem:[#allocation4 + $0x50] sm:$0xff]
      %v1583 = vld [vmem:[#allocation4 + $0x58] sm:$0xff]
      %v1584 = vld [vmem:[#allocation4 + $0x60] sm:$0xff]
      %v1585 = vld [vmem:[#allocation4 + $0x68] sm:$0xff]
      %v1586 = vld [vmem:[#allocation4 + $0x70] sm:$0xff]
      %v1587 = vld [vmem:[#allocation4 + $0x78] sm:$0xff]
      %v1588 = vld [vmem:[#allocation4 + $0x80] sm:$0xff]
      %v1589 = vld [vmem:[#allocation4 + $0x88] sm:$0xff]
      %v1590 = vld [vmem:[#allocation4 + $0x90] sm:$0xff]
      %v1591 = vld [vmem:[#allocation4 + $0x98] sm:$0xff]
      %v1592 = vld [vmem:[#allocation4 + $0xa0] sm:$0xff]
      %v1593 = vld [vmem:[#allocation4 + $0xa8] sm:$0xff]
      %v1594 = vld [vmem:[#allocation4 + $0xb0] sm:$0xff]
      %v1595 = vld [vmem:[#allocation4 + $0xb8] sm:$0xff]
      %v1596 = vld [vmem:[#allocation4 + $0xc0] sm:$0xff]
      %v1597 = vld [vmem:[#allocation4 + $0xc8] sm:$0xff]
      %v1598 = vld [vmem:[#allocation4 + $0xd0] sm:$0xff]
      %v1599 = vld [vmem:[#allocation4 + $0xd8] sm:$0xff]
      %v1600 = vld [vmem:[#allocation4 + $0xe0] sm:$0xff]
      %v1601 = vld [vmem:[#allocation4 + $0xe8] sm:$0xff]
      %v1602 = vld [vmem:[#allocation4 + $0xf0] sm:$0xff]
      %v1603 = vld [vmem:[#allocation4 + $0xf8] sm:$0xff]
      %v1604 = vld [vmem:[#allocation4 + $0x100] sm:$0xff]
      %v1605 = vld [vmem:[#allocation4 + $0x108] sm:$0xff]
      %v1606 = vld [vmem:[#allocation4 + $0x110] sm:$0xff]
      %v1607 = vld [vmem:[#allocation4 + $0x118] sm:$0xff]
      %v1608 = vld [vmem:[#allocation4 + $0x120] sm:$0xff]
      %v1609 = vld [vmem:[#allocation4 + $0x128] sm:$0xff]
      %v1610 = vld [vmem:[#allocation4 + $0x130] sm:$0xff]
      %v1611 = vld [vmem:[#allocation4 + $0x138] sm:$0xff]
      %v1612 = vld [vmem:[#allocation4 + $0x140] sm:$0xff]
      %v1613 = vld [vmem:[#allocation4 + $0x148] sm:$0xff]
      %v1614 = vld [vmem:[#allocation4 + $0x150] sm:$0xff]
      %v1615 = vld [vmem:[#allocation4 + $0x158] sm:$0xff]
      %v1616 = vld [vmem:[#allocation4 + $0x160] sm:$0xff]
      %v1617 = vld [vmem:[#allocation4 + $0x168] sm:$0xff]
      %v1618 = vld [vmem:[#allocation4 + $0x170] sm:$0xff]
      %v1619 = vld [vmem:[#allocation4 + $0x178] sm:$0xff]
      %v1620 = vld [vmem:[#allocation4 + $0x180] sm:$0xff]
      %v1621 = vld [vmem:[#allocation4 + $0x188] sm:$0xff]
      %v1622 = vld [vmem:[#allocation4 + $0x190] sm:$0xff]
      %v1623 = vld [vmem:[#allocation4 + $0x198] sm:$0xff]
      %v1624 = vld [vmem:[#allocation4 + $0x1a0] sm:$0xff]
      %v1625 = vld [vmem:[#allocation4 + $0x1a8] sm:$0xff]
      %v1626 = vld [vmem:[#allocation4 + $0x1b0] sm:$0xff]
      %v1627 = vld [vmem:[#allocation4 + $0x1b8] sm:$0xff]
      %v1628 = vld [vmem:[#allocation4 + $0x1c0] sm:$0xff]
      %v1629 = vld [vmem:[#allocation4 + $0x1c8] sm:$0xff]
      %v1630 = vld [vmem:[#allocation4 + $0x1d0] sm:$0xff]
      %v1631 = vld [vmem:[#allocation4 + $0x1d8] sm:$0xff]
      %v1632 = vld [vmem:[#allocation4 + $0x1e0] sm:$0xff]
      %v1633 = vld [vmem:[#allocation4 + $0x1e8] sm:$0xff]
      %v1634 = vld [vmem:[#allocation4 + $0x1f0] sm:$0xff]
      %v1635 = vld [vmem:[#allocation4 + $0x1f8] sm:$0xff]
      %v1636 = vld [vmem:[#allocation4 + $0x200] sm:$0xff]
      %v1637 = vld [vmem:[#allocation4 + $0x208] sm:$0xff]
      %v1638 = vld [vmem:[#allocation4 + $0x210] sm:$0xff]
      %v1639 = vld [vmem:[#allocation4 + $0x218] sm:$0xff]
      %v1640 = vld [vmem:[#allocation4 + $0x220] sm:$0xff]
      %v1641 = vld [vmem:[#allocation4 + $0x228] sm:$0xff]
      %v1642 = vld [vmem:[#allocation4 + $0x230] sm:$0xff]
      %v1643 = vld [vmem:[#allocation4 + $0x238] sm:$0xff]
      %v1644 = vld [vmem:[%s4] sm:$0xff]
      %1646 = vset.pattern.permute.xlu0 0
      %1647 = vperm.xlu0 %1646, %v1644
      %v1648 = vpop.permute.xlu0 %1647
      %v1651 = vsel %vm337, %v1571, 0
      %1653 = vmatpush.msra.mxu0 %v1632
      %1654 = vmatpush.msra.mxu0 %v1628
      %1655 = vmatpush.msra.mxu0 %v1624
      %1656 = vmatpush.msra.mxu0 %v1620
      %1657 = vmatpush.msra.mxu0 %v1616
      %1658 = vmatpush.msra.mxu0 %v1612
      %1659 = vmatpush.msra.mxu0 %v1608
      %1660 = vmatpush.msra.mxu0 %v1604
      %1661 = vmatpush.msra.mxu0 %v1600
      %1662 = vmatpush.msra.mxu0 %v1596
      %1663 = vmatpush.msra.mxu0 %v1592
      %1664 = vmatpush.msra.mxu0 %v1588
      %1665 = vmatpush.msra.mxu0 %v1584
      %1666 = vmatpush.msra.mxu0 %v1580
      %1667 = vmatpush.msra.mxu0 %v1576
      %1668 = vmatpush.msra.mxu0 %v1572
      %1669 = vmatmul.f32.gmra.mxu0 %v1570
      %v1670 = vpop.f32.mrf.mxu0
      %v1671 = vadd.f32 %v1648, %v1670
      %1672 = vdwg.mxu0
      %1673 = vmatpush.msra.mxu0 0.0
      %1674 = vmatpush.msra.mxu0 0.0
      %1675 = vmatpush.msra.mxu0 0.0
      %1676 = vmatpush.msra.mxu0 0.0
      %1677 = vmatpush.msra.mxu0 0.0
      %1678 = vmatpush.msra.mxu0 0.0
      %1679 = vmatpush.msra.mxu0 0.0
      %1680 = vmatpush.msra.mxu0 0.0
      %1681 = vmatpush.msra.mxu0 0.0
      %1682 = vmatpush.msra.mxu0 0.0
      %1683 = vmatpush.msra.mxu0 0.0
      %1684 = vmatpush.msra.mxu0 0.0
      %1685 = vmatpush.msra.mxu0 0.0
      %1686 = vmatpush.msra.mxu0 0.0
      %1687 = vmatpush.msra.mxu0 %v1640
      %1688 = vmatpush.msra.mxu0 %v1636
      %1689 = vmatmul.f32.gmra.mxu0 %v1651
      %v1690 = vpop.f32.mrf.mxu0
      %v1691 = vadd.f32 %v1671, %v1690
      %1692 = vdwg.mxu0
      %1693 = vmatpush.msra.mxu0 %v1633
      %1694 = vmatpush.msra.mxu0 %v1629
      %1695 = vmatpush.msra.mxu0 %v1625
      %1696 = vmatpush.msra.mxu0 %v1621
      %1697 = vmatpush.msra.mxu0 %v1617
      %1698 = vmatpush.msra.mxu0 %v1613
      %1699 = vmatpush.msra.mxu0 %v1609
      %1700 = vmatpush.msra.mxu0 %v1605
      %1701 = vmatpush.msra.mxu0 %v1601
      %1702 = vmatpush.msra.mxu0 %v1597
      %1703 = vmatpush.msra.mxu0 %v1593
      %1704 = vmatpush.msra.mxu0 %v1589
      %1705 = vmatpush.msra.mxu0 %v1585
      %1706 = vmatpush.msra.mxu0 %v1581
      %1707 = vmatpush.msra.mxu0 %v1577
      %1708 = vmatpush.msra.mxu0 %v1573
      %1709 = vmatmul.f32.gmra.mxu0 %v1570
      %v1710 = vpop.f32.mrf.mxu0
      %v1711 = vadd.f32 %v1648, %v1710
      %1712 = vdwg.mxu0
      %1713 = vmatpush.msra.mxu0 0.0
      %1714 = vmatpush.msra.mxu0 0.0
      %1715 = vmatpush.msra.mxu0 0.0
      %1716 = vmatpush.msra.mxu0 0.0
      %1717 = vmatpush.msra.mxu0 0.0
      %1718 = vmatpush.msra.mxu0 0.0
      %1719 = vmatpush.msra.mxu0 0.0
      %1720 = vmatpush.msra.mxu0 0.0
      %1721 = vmatpush.msra.mxu0 0.0
      %1722 = vmatpush.msra.mxu0 0.0
      %1723 = vmatpush.msra.mxu0 0.0
      %1724 = vmatpush.msra.mxu0 0.0
      %1725 = vmatpush.msra.mxu0 0.0
      %1726 = vmatpush.msra.mxu0 0.0
      %1727 = vmatpush.msra.mxu0 %v1641
      %1728 = vmatpush.msra.mxu0 %v1637
      %1729 = vmatmul.f32.gmra.mxu0 %v1651
      %v1730 = vpop.f32.mrf.mxu0
      %v1731 = vadd.f32 %v1711, %v1730
      %1732 = vdwg.mxu0
      %1733 = vmatpush.msra.mxu0 %v1634
      %1734 = vmatpush.msra.mxu0 %v1630
      %1735 = vmatpush.msra.mxu0 %v1626
      %1736 = vmatpush.msra.mxu0 %v1622
      %1737 = vmatpush.msra.mxu0 %v1618
      %1738 = vmatpush.msra.mxu0 %v1614
      %1739 = vmatpush.msra.mxu0 %v1610
      %1740 = vmatpush.msra.mxu0 %v1606
      %1741 = vmatpush.msra.mxu0 %v1602
      %1742 = vmatpush.msra.mxu0 %v1598
      %1743 = vmatpush.msra.mxu0 %v1594
      %1744 = vmatpush.msra.mxu0 %v1590
      %1745 = vmatpush.msra.mxu0 %v1586
      %1746 = vmatpush.msra.mxu0 %v1582
      %1747 = vmatpush.msra.mxu0 %v1578
      %1748 = vmatpush.msra.mxu0 %v1574
      %1749 = vmatmul.f32.gmra.mxu0 %v1570
      %v1750 = vpop.f32.mrf.mxu0
      %v1751 = vadd.f32 %v1648, %v1750
      %1752 = vdwg.mxu0
      %1753 = vmatpush.msra.mxu0 0.0
      %1754 = vmatpush.msra.mxu0 0.0
      %1755 = vmatpush.msra.mxu0 0.0
      %1756 = vmatpush.msra.mxu0 0.0
      %1757 = vmatpush.msra.mxu0 0.0
      %1758 = vmatpush.msra.mxu0 0.0
      %1759 = vmatpush.msra.mxu0 0.0
      %1760 = vmatpush.msra.mxu0 0.0
      %1761 = vmatpush.msra.mxu0 0.0
      %1762 = vmatpush.msra.mxu0 0.0
      %1763 = vmatpush.msra.mxu0 0.0
      %1764 = vmatpush.msra.mxu0 0.0
      %1765 = vmatpush.msra.mxu0 0.0
      %1766 = vmatpush.msra.mxu0 0.0
      %1767 = vmatpush.msra.mxu0 %v1642
      %1768 = vmatpush.msra.mxu0 %v1638
      %1769 = vmatmul.f32.gmra.mxu0 %v1651
      %v1770 = vpop.f32.mrf.mxu0
      %v1771 = vadd.f32 %v1751, %v1770
      %1772 = vdwg.mxu0
      %1773 = vmatpush.msra.mxu0 %v1635
      %1774 = vmatpush.msra.mxu0 %v1631
      %1775 = vmatpush.msra.mxu0 %v1627
      %1776 = vmatpush.msra.mxu0 %v1623
      %1777 = vmatpush.msra.mxu0 %v1619
      %1778 = vmatpush.msra.mxu0 %v1615
      %1779 = vmatpush.msra.mxu0 %v1611
      %1780 = vmatpush.msra.mxu0 %v1607
      %1781 = vmatpush.msra.mxu0 %v1603
      %1782 = vmatpush.msra.mxu0 %v1599
      %1783 = vmatpush.msra.mxu0 %v1595
      %1784 = vmatpush.msra.mxu0 %v1591
      %1785 = vmatpush.msra.mxu0 %v1587
      %1786 = vmatpush.msra.mxu0 %v1583
      %1787 = vmatpush.msra.mxu0 %v1579
      %1788 = vmatpush.msra.mxu0 %v1575
      %1789 = vmatmul.f32.gmra.mxu0 %v1570
      %v1790 = vpop.f32.mrf.mxu0
      %v1791 = vadd.f32 %v1648, %v1790
      %1792 = vdwg.mxu0
      %1793 = vmatpush.msra.mxu0 0.0
      %1794 = vmatpush.msra.mxu0 0.0
      %1795 = vmatpush.msra.mxu0 0.0
      %1796 = vmatpush.msra.mxu0 0.0
      %1797 = vmatpush.msra.mxu0 0.0
      %1798 = vmatpush.msra.mxu0 0.0
      %1799 = vmatpush.msra.mxu0 0.0
      %1800 = vmatpush.msra.mxu0 0.0
      %1801 = vmatpush.msra.mxu0 0.0
      %1802 = vmatpush.msra.mxu0 0.0
      %1803 = vmatpush.msra.mxu0 0.0
      %1804 = vmatpush.msra.mxu0 0.0
      %1805 = vmatpush.msra.mxu0 0.0
      %1806 = vmatpush.msra.mxu0 0.0
      %1807 = vmatpush.msra.mxu0 %v1643
      %1808 = vmatpush.msra.mxu0 %v1639
      %1809 = vmatmul.f32.gmra.mxu0 %v1651
      %v1810 = vpop.f32.mrf.mxu0
      %v1811 = vadd.f32 %v1791, %v1810
      %1812 = vdwg.mxu0
      %v1813 = vld [vmem:[%s224] sm:$0xff]
      %v1814 = vld [vmem:[%s224 + $0x8] sm:$0xff]
      %v1815 = vadd.f32 %v1691, %v1813
      %v1816 = vadd.f32 %v1731, %v1814
      %1817 = vst [vmem:[%s231] sm:$0xff] %v1815
      %1818 = vst [vmem:[%s231 + $0x8] sm:$0xff] %v1816
      %v1819 = vld [vmem:[%s518] sm:$0xff]
      %v1820 = vld [vmem:[%s518 + $0x8] sm:$0xff]
      %v1821 = vadd.f32 %v1771, %v1819
      %v1822 = vadd.f32 %v1811, %v1820
      %s1823 = scalar_lea.vmem %s231, 16
      %1824 = vst [vmem:[%s1823] sm:$0xff] %v1821
      %1825 = vst [vmem:[%s1823 + $0x8] sm:$0xff] %v1822
      %s1826 = smul.u32 2, %s16
      %p1827 = scmp.lt.s32.totalorder %s1826, 3
      %s1828 = scalar_select %p1827, %s1826, 3
      %s1829 = smul.addr %s1828, 2
      %s1830 = smul.addr %s1829, 8
      %s1831 = scalar_lea.vmem %s5, %s1830
      // Predicated region
      $region41: #{resblock3x3_forward.1} parent=39 // pred_check
        %p1832 = pneg %p144
      $region42: #{resblock3x3_forward.1} parent=39 // pred_check_branch
        %1834 = sbr.rel (%p1832) target = $region44
      $region43: #{resblock3x3_forward.1} parent=39 // pred_region
        %s1835 = smul.u32 2, %s16
      $region44: #{resblock3x3_forward.1} parent=39 // pred_fallthru
        _
    $region40: #{resblock3x3_forward.1} parent=5 // pred_fallthru
      _
    %p1836 = scmp.le.s32.totalorder 2, %s11
    // Predicated region
    $region45: #{resblock3x3_forward.1} parent=5 // pred_check
      %p1837 = pneg %p1836
    $region46: #{resblock3x3_forward.1} parent=5 // pred_check_branch
      %1839 = sbr.rel (%p1837) target = $region48
    $region47: #{resblock3x3_forward.1} parent=5 // pred_region
      %s1840 = ssub.s32 %s11, 2
      // Predicated region
      $region49: #{resblock3x3_forward.1} parent=47 // pred_check
        %p1841 = pneg %p150
      $region50: #{resblock3x3_forward.1} parent=47 // pred_check_branch
        %1843 = sbr.rel (%p1841) target = $region52
      $region51: #{resblock3x3_forward.1} parent=47 // pred_region
        %s1844 = smul.u32 2, %s17
        %p1845 = scmp.lt.s32.totalorder %s1844, 3
        %s1846 = scalar_select %p1845, %s1844, 3
        %s1847 = smul.addr %s1846, 2
        %s1848 = smul.addr %s1847, 8
        %s1849 = scalar_lea.vmem %s5, %s1848
      $region52: #{resblock3x3_forward.1} parent=47 // pred_fallthru
        _
    $region48: #{resblock3x3_forward.1} parent=5 // pred_fallthru
      _
  $region6: #{resblock3x3_forward.1} parent=0 // loop_footer
    %s15 = sadd.s32 1, %s11
  $region7: #{resblock3x3_forward.1} parent=0 // loop_footer_branch
    %10 = sbr.rel target = $region3
  $region8: #{resblock3x3_forward.1} parent=0 // loop_exit
    _

</llo_original>
